<compile_context>
chip_gen: v7x
topology: tpu7x:2x2x1
jax: 0.10.0
libtpu: 0.0.40
codegen_flags: <defaults>
</compile_context>

<pallas_src>
import jax
import jax.numpy as jnp
from jax.experimental import pallas as pl
from jax.experimental.pallas import tpu as pltpu

BN_EPS = 1e-5

N_LATENT = 2
ARCH = [100, 500, 263 * 23]          # = [100, 500, 6049], the module defaults
BATCH = 16
TILE_N = 1024                        # output-feature tile of the final Linear


def _bn_train(h, gamma, beta):
    """BatchNorm1d forward, training-mode (batch stats, biased variance)."""
    mean = jnp.mean(h, axis=0, keepdims=True)
    var = jnp.mean((h - mean) ** 2, axis=0, keepdims=True)
    return (h - mean) * jax.lax.rsqrt(var + BN_EPS) * gamma + beta


def decoder_kernel(x_ref,
                   g0_ref, b0_ref, w0_ref, c0_ref,
                   g1_ref, b1_ref, w1_ref, c1_ref,
                   g2_ref, b2_ref,
                   w2_ref, c2_ref,
                   out_ref):
    # Blocks 0/1 are recomputed per grid step (<2 MFLOP each) so the grid axis
    # carries no cross-step state and stays "parallel" (megacore-splittable).

    # --- block 0: BN(2) -> Linear(2, 100) -----------------------------------
    h = _bn_train(x_ref[...], g0_ref[...], b0_ref[...])
    # K=2 matmul as two VPU broadcast-FMAs instead of an MXU push/pop.
    w0 = w0_ref[...]
    h = h[:, 0:1] * w0[0:1, :] + h[:, 1:2] * w0[1:2, :] + c0_ref[...]

    # --- block 1: ReLU -> BN(100) -> Linear(100, 500) ------------------------
    h = jnp.maximum(h, 0.0)
    h = _bn_train(h, g1_ref[...], b1_ref[...])
    h = jnp.dot(h, w1_ref[...], preferred_element_type=jnp.float32) + c1_ref[...]

    # --- block 2: ReLU -> BN(500) -> Linear(500, TILE_N slice of padded out) -
    h = jnp.maximum(h, 0.0)
    h = _bn_train(h, g2_ref[...], b2_ref[...])
    out_ref[...] = (jnp.dot(h, w2_ref[...], preferred_element_type=jnp.float32)
                    + c2_ref[...])


def decoder_forward(x, params, *, tile_n=TILE_N):
    """x: (B, n_latent) f32 -> (B, arch[-1]) f32.

    1-D grid over the padded output-feature axis of the final Linear; w2/c2 and
    the output are streamed per tile (auto double-buffered), everything else is
    a small full-VMEM resident (same block index every step -> DMA'd once).
    """
    B = x.shape[0]
    w2, c2 = params["w2"], params["c2"]
    k2, out_dim = w2.shape

    n_blocks = pl.cdiv(out_dim, tile_n)
    n_pad = n_blocks * tile_n            # 6049 -> 6144: lane-dense stores
    pad = n_pad - out_dim
    if pad:
        w2 = jnp.pad(w2, ((0, 0), (0, pad)))
        c2 = jnp.pad(c2, ((0, 0), (0, pad)))

    flat = [x,
            params["g0"], params["b0"], params["w0"], params["c0"],
            params["g1"], params["b1"], params["w1"], params["c1"],
            params["g2"], params["b2"],
            w2, c2]

    def resident(arr):
        # Full array, constant block index across the grid -> loaded once.
        return pl.BlockSpec(arr.shape, lambda j: (0, 0))

    in_specs = ([resident(a) for a in flat[:-2]]
                + [pl.BlockSpec((k2, tile_n), lambda j: (0, j)),   # stream w2
                   pl.BlockSpec((1, tile_n), lambda j: (0, j))])   # stream c2
    out_spec = pl.BlockSpec((B, tile_n), lambda j: (0, j))

    flops = 2 * B * (N_LATENT * ARCH[0] + ARCH[0] * ARCH[1] + ARCH[1] * n_pad)
    bytes_accessed = 4 * (sum(int(a.size) for a in flat) + B * n_pad)

    out_pad = pl.pallas_call(
        decoder_kernel,
        out_shape=jax.ShapeDtypeStruct((B, n_pad), jnp.float32),
        grid=(n_blocks,),
        in_specs=in_specs,
        out_specs=out_spec,
        compiler_params=pltpu.CompilerParams(
            # Parallel axis: shards the w2 streaming across both v7x
            # TensorCores; neutral on v5e/v6e.
            dimension_semantics=("parallel",),
            # Fits comfortably; well under v7x's 64 MiB physical VMEM.
            vmem_limit_bytes=16 << 20),
        cost_estimate=pl.CostEstimate(
            flops=flops, transcendentals=0, bytes_accessed=bytes_accessed),
    )(*flat)

    return out_pad[:, :out_dim]


def init_params(key):
    """Deterministic init mimicking PyTorch defaults:
       Linear: U(-1/sqrt(fan_in), 1/sqrt(fan_in)) for weight & bias; BN: gamma=1, beta=0.
       Linear weights are stored transposed: (in, out)."""
    dims = [N_LATENT] + ARCH
    params = {}
    for i in range(3):
        _in, _out = dims[i], dims[i + 1]
        key, kw, kb = jax.random.split(key, 3)
        bound = 1.0 / jnp.sqrt(float(_in))
        params[f"w{i}"] = jax.random.uniform(
            kw, (_in, _out), jnp.float32, -bound, bound)          # (in, out) = W.T
        params[f"c{i}"] = jax.random.uniform(
            kb, (1, _out), jnp.float32, -bound, bound)            # bias
        params[f"g{i}"] = jnp.ones((1, _in), jnp.float32)         # BN gamma
        params[f"b{i}"] = jnp.zeros((1, _in), jnp.float32)        # BN beta
    return params


def decoder_reference(x, params):
    """Pure-JAX reference of the same forward pass (for correctness check)."""
    h = _bn_train(x, params["g0"], params["b0"])
    h = h @ params["w0"] + params["c0"]
    h = jnp.maximum(h, 0.0)
    h = _bn_train(h, params["g1"], params["b1"])
    h = h @ params["w1"] + params["c1"]
    h = jnp.maximum(h, 0.0)
    h = _bn_train(h, params["g2"], params["b2"])
    return h @ params["w2"] + params["c2"]


if __name__ == "__main__":
    key = jax.random.PRNGKey(0)
    key, kx = jax.random.split(key)
    x = jax.random.normal(kx, (BATCH, N_LATENT), jnp.float32)
    params = init_params(key)

    out = decoder_forward(x, params)
    out = jax.block_until_ready(out)

    ref = decoder_reference(x, params)
    assert out.shape == (BATCH, ARCH[-1]), out.shape
    assert jnp.allclose(out, ref, atol=1e-3, rtol=1e-3), float(jnp.abs(out - ref).max())

    print("KERNEL_OK")
</pallas_src>

<mosaic_0001>
module attributes {stable_mosaic.version = 11 : i64} {
  func.func @decoder_kernel(%arg0: i32, %arg1: memref<16x2xf32, #tpu.memory_space<vmem>>, %arg2: memref<1x2xf32, #tpu.memory_space<vmem>>, %arg3: memref<1x2xf32, #tpu.memory_space<vmem>>, %arg4: memref<2x100xf32, #tpu.memory_space<vmem>>, %arg5: memref<1x100xf32, #tpu.memory_space<vmem>>, %arg6: memref<1x100xf32, #tpu.memory_space<vmem>>, %arg7: memref<1x100xf32, #tpu.memory_space<vmem>>, %arg8: memref<100x500xf32, #tpu.memory_space<vmem>>, %arg9: memref<1x500xf32, #tpu.memory_space<vmem>>, %arg10: memref<1x500xf32, #tpu.memory_space<vmem>>, %arg11: memref<1x500xf32, #tpu.memory_space<vmem>>, %arg12: memref<500x1024xf32, #tpu.memory_space<vmem>>, %arg13: memref<1x1024xf32, #tpu.memory_space<vmem>>, %arg14: memref<16x1024xf32, #tpu.memory_space<vmem>>) attributes {dimension_semantics = [#tpu.dimension_semantics<parallel>], iteration_bounds = array<i64: 6>, scalar_prefetch = 0 : i64, scratch_operands = 0 : i64, tpu.core_type = #tpu.core_type<tc>, window_params = [{pipeline_mode = #tpu.pipeline_mode<synchronous>, transform_indices = @transform_0, window_bounds = array<i64: 16, 2>}, {pipeline_mode = #tpu.pipeline_mode<synchronous>, transform_indices = @transform_1, window_bounds = array<i64: 1, 2>}, {pipeline_mode = #tpu.pipeline_mode<synchronous>, transform_indices = @transform_2, window_bounds = array<i64: 1, 2>}, {pipeline_mode = #tpu.pipeline_mode<synchronous>, transform_indices = @transform_3, window_bounds = array<i64: 2, 100>}, {pipeline_mode = #tpu.pipeline_mode<synchronous>, transform_indices = @transform_4, window_bounds = array<i64: 1, 100>}, {pipeline_mode = #tpu.pipeline_mode<synchronous>, transform_indices = @transform_5, window_bounds = array<i64: 1, 100>}, {pipeline_mode = #tpu.pipeline_mode<synchronous>, transform_indices = @transform_6, window_bounds = array<i64: 1, 100>}, {pipeline_mode = #tpu.pipeline_mode<synchronous>, transform_indices = @transform_7, window_bounds = array<i64: 100, 500>}, {pipeline_mode = #tpu.pipeline_mode<synchronous>, transform_indices = @transform_8, window_bounds = array<i64: 1, 500>}, {pipeline_mode = #tpu.pipeline_mode<synchronous>, transform_indices = @transform_9, window_bounds = array<i64: 1, 500>}, {pipeline_mode = #tpu.pipeline_mode<synchronous>, transform_indices = @transform_10, window_bounds = array<i64: 1, 500>}, {transform_indices = @transform_11, window_bounds = array<i64: 500, 1024>}, {transform_indices = @transform_12, window_bounds = array<i64: 1, 1024>}, {transform_indices = @transform_13, window_bounds = array<i64: 16, 1024>}]} {
    %c0 = arith.constant 0 : index
    %c0_0 = arith.constant 0 : index
    %0 = vector.load %arg1[%c0, %c0_0] : memref<16x2xf32, #tpu.memory_space<vmem>>, vector<16x2xf32>
    %c0_1 = arith.constant 0 : index
    %c0_2 = arith.constant 0 : index
    %1 = vector.load %arg2[%c0_1, %c0_2] : memref<1x2xf32, #tpu.memory_space<vmem>>, vector<1x2xf32>
    %c0_3 = arith.constant 0 : index
    %c0_4 = arith.constant 0 : index
    %2 = vector.load %arg3[%c0_3, %c0_4] : memref<1x2xf32, #tpu.memory_space<vmem>>, vector<1x2xf32>
    %cst = arith.constant dense<0.000000e+00> : vector<2xf32>
    %3 = vector.multi_reduction <add>, %0, %cst [0] : vector<16x2xf32> to vector<2xf32>
    %4 = vector.shape_cast %3 : vector<2xf32> to vector<1x2xf32>
    %cst_5 = arith.constant 1.600000e+01 : f32
    %5 = vector.broadcast %cst_5 : f32 to vector<1x2xf32>
    %6 = arith.divf %4, %5 : vector<1x2xf32>
    %7 = vector.broadcast %6 : vector<1x2xf32> to vector<16x2xf32>
    %8 = arith.subf %0, %7 : vector<16x2xf32>
    %9 = arith.mulf %8, %8 : vector<16x2xf32>
    %cst_6 = arith.constant dense<0.000000e+00> : vector<2xf32>
    %10 = vector.multi_reduction <add>, %9, %cst_6 [0] : vector<16x2xf32> to vector<2xf32>
    %11 = vector.shape_cast %10 : vector<2xf32> to vector<1x2xf32>
    %cst_7 = arith.constant 1.600000e+01 : f32
    %12 = vector.broadcast %cst_7 : f32 to vector<1x2xf32>
    %13 = arith.divf %11, %12 : vector<1x2xf32>
    %14 = vector.broadcast %6 : vector<1x2xf32> to vector<16x2xf32>
    %15 = arith.subf %0, %14 : vector<16x2xf32>
    %cst_8 = arith.constant 9.99999974E-6 : f32
    %16 = vector.broadcast %cst_8 : f32 to vector<1x2xf32>
    %17 = arith.addf %13, %16 : vector<1x2xf32>
    %18 = math.rsqrt %17 : vector<1x2xf32>
    %19 = vector.broadcast %18 : vector<1x2xf32> to vector<16x2xf32>
    %20 = arith.mulf %15, %19 : vector<16x2xf32>
    %21 = vector.broadcast %1 : vector<1x2xf32> to vector<16x2xf32>
    %22 = arith.mulf %20, %21 : vector<16x2xf32>
    %23 = vector.broadcast %2 : vector<1x2xf32> to vector<16x2xf32>
    %24 = arith.addf %22, %23 : vector<16x2xf32>
    %c0_9 = arith.constant 0 : index
    %c0_10 = arith.constant 0 : index
    %25 = vector.load %arg4[%c0_9, %c0_10] : memref<2x100xf32, #tpu.memory_space<vmem>>, vector<2x100xf32>
    %26 = vector.extract_strided_slice %24 {offsets = [0, 0], sizes = [16, 1], strides = [1, 1]} : vector<16x2xf32> to vector<16x1xf32>
    %27 = vector.extract_strided_slice %25 {offsets = [0, 0], sizes = [1, 100], strides = [1, 1]} : vector<2x100xf32> to vector<1x100xf32>
    %28 = vector.broadcast %26 : vector<16x1xf32> to vector<16x100xf32>
    %29 = vector.broadcast %27 : vector<1x100xf32> to vector<16x100xf32>
    %30 = arith.mulf %28, %29 : vector<16x100xf32>
    %31 = vector.extract_strided_slice %24 {offsets = [0, 1], sizes = [16, 1], strides = [1, 1]} : vector<16x2xf32> to vector<16x1xf32>
    %32 = vector.extract_strided_slice %25 {offsets = [1, 0], sizes = [1, 100], strides = [1, 1]} : vector<2x100xf32> to vector<1x100xf32>
    %33 = vector.broadcast %31 : vector<16x1xf32> to vector<16x100xf32>
    %34 = vector.broadcast %32 : vector<1x100xf32> to vector<16x100xf32>
    %35 = arith.mulf %33, %34 : vector<16x100xf32>
    %36 = arith.addf %30, %35 : vector<16x100xf32>
    %c0_11 = arith.constant 0 : index
    %c0_12 = arith.constant 0 : index
    %37 = vector.load %arg5[%c0_11, %c0_12] : memref<1x100xf32, #tpu.memory_space<vmem>>, vector<1x100xf32>
    %38 = vector.broadcast %37 : vector<1x100xf32> to vector<16x100xf32>
    %39 = arith.addf %36, %38 : vector<16x100xf32>
    %cst_13 = arith.constant 0.000000e+00 : f32
    %40 = vector.broadcast %cst_13 : f32 to vector<16x100xf32>
    %41 = arith.maximumf %39, %40 : vector<16x100xf32>
    %c0_14 = arith.constant 0 : index
    %c0_15 = arith.constant 0 : index
    %42 = vector.load %arg6[%c0_14, %c0_15] : memref<1x100xf32, #tpu.memory_space<vmem>>, vector<1x100xf32>
    %c0_16 = arith.constant 0 : index
    %c0_17 = arith.constant 0 : index
    %43 = vector.load %arg7[%c0_16, %c0_17] : memref<1x100xf32, #tpu.memory_space<vmem>>, vector<1x100xf32>
    %cst_18 = arith.constant dense<0.000000e+00> : vector<100xf32>
    %44 = vector.multi_reduction <add>, %41, %cst_18 [0] : vector<16x100xf32> to vector<100xf32>
    %45 = vector.shape_cast %44 : vector<100xf32> to vector<1x100xf32>
    %cst_19 = arith.constant 1.600000e+01 : f32
    %46 = vector.broadcast %cst_19 : f32 to vector<1x100xf32>
    %47 = arith.divf %45, %46 : vector<1x100xf32>
    %48 = vector.broadcast %47 : vector<1x100xf32> to vector<16x100xf32>
    %49 = arith.subf %41, %48 : vector<16x100xf32>
    %50 = arith.mulf %49, %49 : vector<16x100xf32>
    %cst_20 = arith.constant dense<0.000000e+00> : vector<100xf32>
    %51 = vector.multi_reduction <add>, %50, %cst_20 [0] : vector<16x100xf32> to vector<100xf32>
    %52 = vector.shape_cast %51 : vector<100xf32> to vector<1x100xf32>
    %cst_21 = arith.constant 1.600000e+01 : f32
    %53 = vector.broadcast %cst_21 : f32 to vector<1x100xf32>
    %54 = arith.divf %52, %53 : vector<1x100xf32>
    %55 = vector.broadcast %47 : vector<1x100xf32> to vector<16x100xf32>
    %56 = arith.subf %41, %55 : vector<16x100xf32>
    %cst_22 = arith.constant 9.99999974E-6 : f32
    %57 = vector.broadcast %cst_22 : f32 to vector<1x100xf32>
    %58 = arith.addf %54, %57 : vector<1x100xf32>
    %59 = math.rsqrt %58 : vector<1x100xf32>
    %60 = vector.broadcast %59 : vector<1x100xf32> to vector<16x100xf32>
    %61 = arith.mulf %56, %60 : vector<16x100xf32>
    %62 = vector.broadcast %42 : vector<1x100xf32> to vector<16x100xf32>
    %63 = arith.mulf %61, %62 : vector<16x100xf32>
    %64 = vector.broadcast %43 : vector<1x100xf32> to vector<16x100xf32>
    %65 = arith.addf %63, %64 : vector<16x100xf32>
    %c0_23 = arith.constant 0 : index
    %c0_24 = arith.constant 0 : index
    %66 = vector.load %arg8[%c0_23, %c0_24] : memref<100x500xf32, #tpu.memory_space<vmem>>, vector<100x500xf32>
    %cst_25 = arith.constant dense<0.000000e+00> : vector<16x500xf32>
    %67 = tpu.matmul %65, %66, %cst_25 {dimension_numbers = #tpu.dot_dimension_numbers<[1], [0], [0], [1], [0, 0, 1, 1], [], []>} : vector<16x100xf32>, vector<100x500xf32>, vector<16x500xf32> -> vector<16x500xf32>
    %c0_26 = arith.constant 0 : index
    %c0_27 = arith.constant 0 : index
    %68 = vector.load %arg9[%c0_26, %c0_27] : memref<1x500xf32, #tpu.memory_space<vmem>>, vector<1x500xf32>
    %69 = vector.broadcast %68 : vector<1x500xf32> to vector<16x500xf32>
    %70 = arith.addf %67, %69 : vector<16x500xf32>
    %cst_28 = arith.constant 0.000000e+00 : f32
    %71 = vector.broadcast %cst_28 : f32 to vector<16x500xf32>
    %72 = arith.maximumf %70, %71 : vector<16x500xf32>
    %c0_29 = arith.constant 0 : index
    %c0_30 = arith.constant 0 : index
    %73 = vector.load %arg10[%c0_29, %c0_30] : memref<1x500xf32, #tpu.memory_space<vmem>>, vector<1x500xf32>
    %c0_31 = arith.constant 0 : index
    %c0_32 = arith.constant 0 : index
    %74 = vector.load %arg11[%c0_31, %c0_32] : memref<1x500xf32, #tpu.memory_space<vmem>>, vector<1x500xf32>
    %cst_33 = arith.constant dense<0.000000e+00> : vector<500xf32>
    %75 = vector.multi_reduction <add>, %72, %cst_33 [0] : vector<16x500xf32> to vector<500xf32>
    %76 = vector.shape_cast %75 : vector<500xf32> to vector<1x500xf32>
    %cst_34 = arith.constant 1.600000e+01 : f32
    %77 = vector.broadcast %cst_34 : f32 to vector<1x500xf32>
    %78 = arith.divf %76, %77 : vector<1x500xf32>
    %79 = vector.broadcast %78 : vector<1x500xf32> to vector<16x500xf32>
    %80 = arith.subf %72, %79 : vector<16x500xf32>
    %81 = arith.mulf %80, %80 : vector<16x500xf32>
    %cst_35 = arith.constant dense<0.000000e+00> : vector<500xf32>
    %82 = vector.multi_reduction <add>, %81, %cst_35 [0] : vector<16x500xf32> to vector<500xf32>
    %83 = vector.shape_cast %82 : vector<500xf32> to vector<1x500xf32>
    %cst_36 = arith.constant 1.600000e+01 : f32
    %84 = vector.broadcast %cst_36 : f32 to vector<1x500xf32>
    %85 = arith.divf %83, %84 : vector<1x500xf32>
    %86 = vector.broadcast %78 : vector<1x500xf32> to vector<16x500xf32>
    %87 = arith.subf %72, %86 : vector<16x500xf32>
    %cst_37 = arith.constant 9.99999974E-6 : f32
    %88 = vector.broadcast %cst_37 : f32 to vector<1x500xf32>
    %89 = arith.addf %85, %88 : vector<1x500xf32>
    %90 = math.rsqrt %89 : vector<1x500xf32>
    %91 = vector.broadcast %90 : vector<1x500xf32> to vector<16x500xf32>
    %92 = arith.mulf %87, %91 : vector<16x500xf32>
    %93 = vector.broadcast %73 : vector<1x500xf32> to vector<16x500xf32>
    %94 = arith.mulf %92, %93 : vector<16x500xf32>
    %95 = vector.broadcast %74 : vector<1x500xf32> to vector<16x500xf32>
    %96 = arith.addf %94, %95 : vector<16x500xf32>
    %c0_38 = arith.constant 0 : index
    %c0_39 = arith.constant 0 : index
    %97 = vector.load %arg12[%c0_38, %c0_39] : memref<500x1024xf32, #tpu.memory_space<vmem>>, vector<500x1024xf32>
    %cst_40 = arith.constant dense<0.000000e+00> : vector<16x1024xf32>
    %98 = tpu.matmul %96, %97, %cst_40 {dimension_numbers = #tpu.dot_dimension_numbers<[1], [0], [0], [1], [0, 0, 1, 1], [], []>} : vector<16x500xf32>, vector<500x1024xf32>, vector<16x1024xf32> -> vector<16x1024xf32>
    %c0_41 = arith.constant 0 : index
    %c0_42 = arith.constant 0 : index
    %99 = vector.load %arg13[%c0_41, %c0_42] : memref<1x1024xf32, #tpu.memory_space<vmem>>, vector<1x1024xf32>
    %100 = vector.broadcast %99 : vector<1x1024xf32> to vector<16x1024xf32>
    %101 = arith.addf %98, %100 : vector<16x1024xf32>
    %c0_43 = arith.constant 0 : index
    %c0_44 = arith.constant 0 : index
    %102 = vector.load %arg14[%c0_43, %c0_44] : memref<16x1024xf32, #tpu.memory_space<vmem>>, vector<16x1024xf32>
    tpu.vector_store %arg14[%c0_43, %c0_44], %101 {strides = array<i32>} : memref<16x1024xf32, #tpu.memory_space<vmem>>, vector<16x1024xf32>,
    return
  }
  func.func @transform_0(%arg0: i32) -> (i32, i32) {
    %c0_i32 = arith.constant 0 : i32
    %c0_i32_0 = arith.constant 0 : i32
    %c0_i32_1 = arith.constant 0 : i32
    return %c0_i32, %c0_i32_0 : i32, i32
  }
  func.func @transform_1(%arg0: i32) -> (i32, i32) {
    %c0_i32 = arith.constant 0 : i32
    %c0_i32_0 = arith.constant 0 : i32
    %c0_i32_1 = arith.constant 0 : i32
    return %c0_i32, %c0_i32_0 : i32, i32
  }
  func.func @transform_2(%arg0: i32) -> (i32, i32) {
    %c0_i32 = arith.constant 0 : i32
    %c0_i32_0 = arith.constant 0 : i32
    %c0_i32_1 = arith.constant 0 : i32
    return %c0_i32, %c0_i32_0 : i32, i32
  }
  func.func @transform_3(%arg0: i32) -> (i32, i32) {
    %c0_i32 = arith.constant 0 : i32
    %c0_i32_0 = arith.constant 0 : i32
    %c0_i32_1 = arith.constant 0 : i32
    return %c0_i32, %c0_i32_0 : i32, i32
  }
  func.func @transform_4(%arg0: i32) -> (i32, i32) {
    %c0_i32 = arith.constant 0 : i32
    %c0_i32_0 = arith.constant 0 : i32
    %c0_i32_1 = arith.constant 0 : i32
    return %c0_i32, %c0_i32_0 : i32, i32
  }
  func.func @transform_5(%arg0: i32) -> (i32, i32) {
    %c0_i32 = arith.constant 0 : i32
    %c0_i32_0 = arith.constant 0 : i32
    %c0_i32_1 = arith.constant 0 : i32
    return %c0_i32, %c0_i32_0 : i32, i32
  }
  func.func @transform_6(%arg0: i32) -> (i32, i32) {
    %c0_i32 = arith.constant 0 : i32
    %c0_i32_0 = arith.constant 0 : i32
    %c0_i32_1 = arith.constant 0 : i32
    return %c0_i32, %c0_i32_0 : i32, i32
  }
  func.func @transform_7(%arg0: i32) -> (i32, i32) {
    %c0_i32 = arith.constant 0 : i32
    %c0_i32_0 = arith.constant 0 : i32
    %c0_i32_1 = arith.constant 0 : i32
    return %c0_i32, %c0_i32_0 : i32, i32
  }
  func.func @transform_8(%arg0: i32) -> (i32, i32) {
    %c0_i32 = arith.constant 0 : i32
    %c0_i32_0 = arith.constant 0 : i32
    %c0_i32_1 = arith.constant 0 : i32
    return %c0_i32, %c0_i32_0 : i32, i32
  }
  func.func @transform_9(%arg0: i32) -> (i32, i32) {
    %c0_i32 = arith.constant 0 : i32
    %c0_i32_0 = arith.constant 0 : i32
    %c0_i32_1 = arith.constant 0 : i32
    return %c0_i32, %c0_i32_0 : i32, i32
  }
  func.func @transform_10(%arg0: i32) -> (i32, i32) {
    %c0_i32 = arith.constant 0 : i32
    %c0_i32_0 = arith.constant 0 : i32
    %c0_i32_1 = arith.constant 0 : i32
    return %c0_i32, %c0_i32_0 : i32, i32
  }
  func.func @transform_11(%arg0: i32) -> (i32, i32) {
    %c0_i32 = arith.constant 0 : i32
    %c0_i32_0 = arith.constant 0 : i32
    return %c0_i32, %arg0 : i32, i32
  }
  func.func @transform_12(%arg0: i32) -> (i32, i32) {
    %c0_i32 = arith.constant 0 : i32
    %c0_i32_0 = arith.constant 0 : i32
    return %c0_i32, %arg0 : i32, i32
  }
  func.func @transform_13(%arg0: i32) -> (i32, i32) {
    %c0_i32 = arith.constant 0 : i32
    %c0_i32_0 = arith.constant 0 : i32
    return %c0_i32, %arg0 : i32, i32
  }
}

</mosaic_0001>

<llo_original>
// kernel: tpu_custom_call.1
$region0: #{tpu_custom_call.1}
  #allocation0 [shape = 'u32[]', space=smem, size = 0x4, offset = 0x4, fixed_abs, tag = 'smem constant byte address 0x4 - core index']
  #allocation1 [shape = 'u32[144,128]{1,0:T(1,128)}', space=vmem, size = 0x12000, scoped, tag = 'internal scratch']
  %s0 = inlined_call_operand.vmem [shape: f32[16,2], index: 0, kind: input, shape index: {}]
  %s1 = inlined_call_operand.hbm [shape: f32[1,2], index: 1, kind: input, shape index: {}]
  %s2 = inlined_call_operand.hbm [shape: f32[1,2], index: 2, kind: input, shape index: {}]
  %s3 = inlined_call_operand.hbm [shape: f32[2,100], index: 3, kind: input, shape index: {}]
  %s4 = inlined_call_operand.hbm [shape: f32[1,100], index: 4, kind: input, shape index: {}]
  %s5 = inlined_call_operand.hbm [shape: f32[1,100], index: 5, kind: input, shape index: {}]
  %s6 = inlined_call_operand.hbm [shape: f32[1,100], index: 6, kind: input, shape index: {}]
  %s7 = inlined_call_operand.hbm [shape: f32[100,500], index: 7, kind: input, shape index: {}]
  %s8 = inlined_call_operand.hbm [shape: f32[1,500], index: 8, kind: input, shape index: {}]
  %s9 = inlined_call_operand.hbm [shape: f32[1,500], index: 9, kind: input, shape index: {}]
  %s10 = inlined_call_operand.hbm [shape: f32[1,500], index: 10, kind: input, shape index: {}]
  %s11 = inlined_call_operand.hbm [shape: f32[500,6144], index: 11, kind: input, shape index: {}]
  %s12 = inlined_call_operand.hbm [shape: f32[1,6144], index: 12, kind: input, shape index: {}]
  %s13 = inlined_call_operand.hbm [shape: f32[16,6144], index: 13, kind: output, shape index: {}]
  %s14 = sld [smem:[#allocation0]]
  $region133: #{tpu_custom_call.1} parent=0
    _
  %s16 = ssub.s32 1, %s14
  %s17 = scalar_select 0, %s16, %s14
  $region1: #{tpu_custom_call.1} parent=0
    #allocation2 [shape = 'u8[512]{0}', space=vmem, size = 0x400, scoped, tag = 'input window, operand 1, single buffered']
    #allocation3 [shape = 's32[2]{0}', space=sflag, size = 0x8, scoped, tag = 'scoped memory for tpu_custom_call.1']
    #allocation4 [shape = 's32[2]{0}', space=sflag, size = 0x8, scoped, tag = 'scoped memory for tpu_custom_call.1']
    #allocation5 [shape = 'u8[512]{0}', space=vmem, size = 0x400, scoped, tag = 'input window, operand 2, single buffered']
    #allocation6 [shape = 's32[1]{0}', space=sflag, size = 0x4, scoped, tag = 'scoped memory for tpu_custom_call.1']
    #allocation7 [shape = 'u8[1024]{0}', space=vmem, size = 0x400, scoped, tag = 'input window, operand 3, single buffered']
    #allocation8 [shape = 'u8[512]{0}', space=vmem, size = 0x400, scoped, tag = 'input window, operand 4, single buffered']
    #allocation9 [shape = 's32[1]{0}', space=sflag, size = 0x4, scoped, tag = 'scoped memory for tpu_custom_call.1']
    #allocation10 [shape = 'u8[512]{0}', space=vmem, size = 0x400, scoped, tag = 'input window, operand 5, single buffered']
    #allocation11 [shape = 'u8[512]{0}', space=vmem, size = 0x400, scoped, tag = 'input window, operand 6, single buffered']
    #allocation12 [shape = 's32[1]{0}', space=sflag, size = 0x4, scoped, tag = 'scoped memory for tpu_custom_call.1']
    #allocation13 [shape = 'u8[212992]{0}', space=vmem, size = 0x34000, scoped, tag = 'input window, operand 7, single buffered']
    #allocation14 [shape = 'u8[2048]{0}', space=vmem, size = 0x800, scoped, tag = 'input window, operand 8, single buffered']
    #allocation15 [shape = 's32[1]{0}', space=sflag, size = 0x4, scoped, tag = 'scoped memory for tpu_custom_call.1']
    #allocation16 [shape = 'u8[2048]{0}', space=vmem, size = 0x800, scoped, tag = 'input window, operand 9, single buffered']
    #allocation17 [shape = 'u8[2048]{0}', space=vmem, size = 0x800, scoped, tag = 'input window, operand 10, single buffered']
    #allocation18 [shape = 's32[1]{0}', space=sflag, size = 0x4, scoped, tag = 'scoped memory for tpu_custom_call.1']
    #allocation19 [shape = 'u8[4128768]{0}', space=vmem, size = 0x3f0000, scoped, tag = 'input window, operand 11']
    #allocation20 [shape = 'u8[8192]{0}', space=vmem, size = 0x2000, scoped, tag = 'input window, operand 12']
    #allocation21 [shape = 'u8[131072]{0}', space=vmem, size = 0x20000, scoped, tag = 'output window, operand 0']
    %18 = vsyncpa [#allocation3], 0
    %19 = vsyncpa [#allocation6], 0
    %20 = vsyncpa [#allocation9], 0
    %21 = vsyncpa [#allocation12], 0
    %22 = vsyncpa [#allocation15], 0
    %23 = vsyncpa [#allocation18], 0
    %24 = vsyncpa [#allocation4], 0
    %s25 = scalar_lea.sflag [#allocation4], 1
    %26 = vsyncpa %s25, 0
    loop: start=0, step=1, limit=8
    $region2: #{tpu_custom_call.1} parent=1 // loop_pre_header
      _
    $region3: #{tpu_custom_call.1} parent=1 // loop_header
      %s28 = sphi 0, %s32
      %p29 = scmp.ge.s32.totalorder %s28, 8
      %s36 = sphi 0, %s36
      %s38 = sphi 0, %s36
      %s39 = sphi 0, %s38
      %s53 = sphi 0, %s39
      %s57 = sphi 0, %s57
      %s59 = sphi 0, %s57
      %s60 = sphi 0, %s59
      %s74 = sphi 0, %s60
      %s78 = sphi 0, %s78
      %s80 = sphi 0, %s78
      %s81 = sphi 0, %s80
      %s95 = sphi 0, %s81
      %s99 = sphi 0, %s99
      %s101 = sphi 0, %s99
      %s102 = sphi 0, %s101
      %s116 = sphi 0, %s102
      %s120 = sphi 0, %s120
      %s122 = sphi 0, %s120
      %s123 = sphi 0, %s122
      %s137 = sphi 0, %s123
      %s141 = sphi 0, %s141
      %s143 = sphi 0, %s141
      %s144 = sphi 0, %s143
      %s158 = sphi 0, %s144
      %s162 = sphi 0, %s162
      %s164 = sphi 0, %s162
      %s165 = sphi 0, %s164
      %s179 = sphi 0, %s165
      %s183 = sphi 0, %s183
      %s185 = sphi 0, %s183
      %s186 = sphi 0, %s185
      %s200 = sphi 0, %s186
      %s204 = sphi 0, %s204
      %s206 = sphi 0, %s204
      %s207 = sphi 0, %s206
      %s221 = sphi 0, %s207
      %s225 = sphi 0, %s225
      %s227 = sphi 0, %s225
      %s228 = sphi 0, %s227
      %s242 = sphi 0, %s228
      %s246 = sphi 0, %s246
      %s248 = sphi 0, %s246
      %s249 = sphi 0, %s248
      %s263 = sphi 0, %s249
      %s269 = sphi 0, %s271
      %s272 = sphi 0, %s269
      %s273 = sphi 0, %s272
      %s289 = sphi 0, %s273
      %s295 = sphi 0, %s297
      %s298 = sphi 0, %s295
      %s299 = sphi 0, %s298
      %s315 = sphi 0, %s299
      %s321 = sphi 0, %s323
      %s324 = sphi 0, %s321
      %s325 = sphi 0, %s324
      %s341 = sphi 0, %s325
    $region4: #{tpu_custom_call.1} parent=1 // loop_header_branch
      %31 = sbr.rel (%p29) target = $region8
    $region5: #{tpu_custom_call.1} parent=1 // loop_body
      %s33 = ssub.s32 %s28, 1
      %s34 = ssub.s32 %s28, 2
      %s35 = sadd.s32 %s28, 1
      %s37 = sadd.s32 %s36, 1
      %p40 = scmp.eq.s32.totalorder %s28, 5
      %p41 = scmp.ne.s32.totalorder %s36, %s38
      %p42 = scmp.eq.s32.totalorder %s28, 0
      %p43 = por %p41, %p42
      %p44 = scmp.ne.s32.totalorder %s36, %s38
      %p45 = scmp.eq.s32.totalorder %s33, 5
      %p46 = por %p44, %p45
      %p47 = scmp.ne.s32.totalorder %s38, %s39
      %p48 = scmp.eq.s32.totalorder %s33, 0
      %p49 = por %p47, %p48
      %p50 = scmp.ne.s32.totalorder %s38, %s39
      %p51 = scmp.eq.s32.totalorder %s34, 5
      %p52 = por %p50, %p51
      %p54 = scmp.ne.s32.totalorder %s39, %s53
      %p55 = scmp.eq.s32.totalorder %s34, 0
      %p56 = por %p54, %p55
      %s58 = sadd.s32 %s57, 1
      %p61 = scmp.eq.s32.totalorder %s28, 5
      %p62 = scmp.ne.s32.totalorder %s57, %s59
      %p63 = scmp.eq.s32.totalorder %s28, 0
      %p64 = por %p62, %p63
      %p65 = scmp.ne.s32.totalorder %s57, %s59
      %p66 = scmp.eq.s32.totalorder %s33, 5
      %p67 = por %p65, %p66
      %p68 = scmp.ne.s32.totalorder %s59, %s60
      %p69 = scmp.eq.s32.totalorder %s33, 0
      %p70 = por %p68, %p69
      %p71 = scmp.ne.s32.totalorder %s59, %s60
      %p72 = scmp.eq.s32.totalorder %s34, 5
      %p73 = por %p71, %p72
      %p75 = scmp.ne.s32.totalorder %s60, %s74
      %p76 = scmp.eq.s32.totalorder %s34, 0
      %p77 = por %p75, %p76
      %s79 = sadd.s32 %s78, 1
      %p82 = scmp.eq.s32.totalorder %s28, 5
      %p83 = scmp.ne.s32.totalorder %s78, %s80
      %p84 = scmp.eq.s32.totalorder %s28, 0
      %p85 = por %p83, %p84
      %p86 = scmp.ne.s32.totalorder %s78, %s80
      %p87 = scmp.eq.s32.totalorder %s33, 5
      %p88 = por %p86, %p87
      %p89 = scmp.ne.s32.totalorder %s80, %s81
      %p90 = scmp.eq.s32.totalorder %s33, 0
      %p91 = por %p89, %p90
      %p92 = scmp.ne.s32.totalorder %s80, %s81
      %p93 = scmp.eq.s32.totalorder %s34, 5
      %p94 = por %p92, %p93
      %p96 = scmp.ne.s32.totalorder %s81, %s95
      %p97 = scmp.eq.s32.totalorder %s34, 0
      %p98 = por %p96, %p97
      %s100 = sadd.s32 %s99, 1
      %p103 = scmp.eq.s32.totalorder %s28, 5
      %p104 = scmp.ne.s32.totalorder %s99, %s101
      %p105 = scmp.eq.s32.totalorder %s28, 0
      %p106 = por %p104, %p105
      %p107 = scmp.ne.s32.totalorder %s99, %s101
      %p108 = scmp.eq.s32.totalorder %s33, 5
      %p109 = por %p107, %p108
      %p110 = scmp.ne.s32.totalorder %s101, %s102
      %p111 = scmp.eq.s32.totalorder %s33, 0
      %p112 = por %p110, %p111
      %p113 = scmp.ne.s32.totalorder %s101, %s102
      %p114 = scmp.eq.s32.totalorder %s34, 5
      %p115 = por %p113, %p114
      %p117 = scmp.ne.s32.totalorder %s102, %s116
      %p118 = scmp.eq.s32.totalorder %s34, 0
      %p119 = por %p117, %p118
      %s121 = sadd.s32 %s120, 1
      %p124 = scmp.eq.s32.totalorder %s28, 5
      %p125 = scmp.ne.s32.totalorder %s120, %s122
      %p126 = scmp.eq.s32.totalorder %s28, 0
      %p127 = por %p125, %p126
      %p128 = scmp.ne.s32.totalorder %s120, %s122
      %p129 = scmp.eq.s32.totalorder %s33, 5
      %p130 = por %p128, %p129
      %p131 = scmp.ne.s32.totalorder %s122, %s123
      %p132 = scmp.eq.s32.totalorder %s33, 0
      %p133 = por %p131, %p132
      %p134 = scmp.ne.s32.totalorder %s122, %s123
      %p135 = scmp.eq.s32.totalorder %s34, 5
      %p136 = por %p134, %p135
      %p138 = scmp.ne.s32.totalorder %s123, %s137
      %p139 = scmp.eq.s32.totalorder %s34, 0
      %p140 = por %p138, %p139
      %s142 = sadd.s32 %s141, 1
      %p145 = scmp.eq.s32.totalorder %s28, 5
      %p146 = scmp.ne.s32.totalorder %s141, %s143
      %p147 = scmp.eq.s32.totalorder %s28, 0
      %p148 = por %p146, %p147
      %p149 = scmp.ne.s32.totalorder %s141, %s143
      %p150 = scmp.eq.s32.totalorder %s33, 5
      %p151 = por %p149, %p150
      %p152 = scmp.ne.s32.totalorder %s143, %s144
      %p153 = scmp.eq.s32.totalorder %s33, 0
      %p154 = por %p152, %p153
      %p155 = scmp.ne.s32.totalorder %s143, %s144
      %p156 = scmp.eq.s32.totalorder %s34, 5
      %p157 = por %p155, %p156
      %p159 = scmp.ne.s32.totalorder %s144, %s158
      %p160 = scmp.eq.s32.totalorder %s34, 0
      %p161 = por %p159, %p160
      %s163 = sadd.s32 %s162, 1
      %p166 = scmp.eq.s32.totalorder %s28, 5
      %p167 = scmp.ne.s32.totalorder %s162, %s164
      %p168 = scmp.eq.s32.totalorder %s28, 0
      %p169 = por %p167, %p168
      %p170 = scmp.ne.s32.totalorder %s162, %s164
      %p171 = scmp.eq.s32.totalorder %s33, 5
      %p172 = por %p170, %p171
      %p173 = scmp.ne.s32.totalorder %s164, %s165
      %p174 = scmp.eq.s32.totalorder %s33, 0
      %p175 = por %p173, %p174
      %p176 = scmp.ne.s32.totalorder %s164, %s165
      %p177 = scmp.eq.s32.totalorder %s34, 5
      %p178 = por %p176, %p177
      %p180 = scmp.ne.s32.totalorder %s165, %s179
      %p181 = scmp.eq.s32.totalorder %s34, 0
      %p182 = por %p180, %p181
      %s184 = sadd.s32 %s183, 1
      %p187 = scmp.eq.s32.totalorder %s28, 5
      %p188 = scmp.ne.s32.totalorder %s183, %s185
      %p189 = scmp.eq.s32.totalorder %s28, 0
      %p190 = por %p188, %p189
      %p191 = scmp.ne.s32.totalorder %s183, %s185
      %p192 = scmp.eq.s32.totalorder %s33, 5
      %p193 = por %p191, %p192
      %p194 = scmp.ne.s32.totalorder %s185, %s186
      %p195 = scmp.eq.s32.totalorder %s33, 0
      %p196 = por %p194, %p195
      %p197 = scmp.ne.s32.totalorder %s185, %s186
      %p198 = scmp.eq.s32.totalorder %s34, 5
      %p199 = por %p197, %p198
      %p201 = scmp.ne.s32.totalorder %s186, %s200
      %p202 = scmp.eq.s32.totalorder %s34, 0
      %p203 = por %p201, %p202
      %s205 = sadd.s32 %s204, 1
      %p208 = scmp.eq.s32.totalorder %s28, 5
      %p209 = scmp.ne.s32.totalorder %s204, %s206
      %p210 = scmp.eq.s32.totalorder %s28, 0
      %p211 = por %p209, %p210
      %p212 = scmp.ne.s32.totalorder %s204, %s206
      %p213 = scmp.eq.s32.totalorder %s33, 5
      %p214 = por %p212, %p213
      %p215 = scmp.ne.s32.totalorder %s206, %s207
      %p216 = scmp.eq.s32.totalorder %s33, 0
      %p217 = por %p215, %p216
      %p218 = scmp.ne.s32.totalorder %s206, %s207
      %p219 = scmp.eq.s32.totalorder %s34, 5
      %p220 = por %p218, %p219
      %p222 = scmp.ne.s32.totalorder %s207, %s221
      %p223 = scmp.eq.s32.totalorder %s34, 0
      %p224 = por %p222, %p223
      %s226 = sadd.s32 %s225, 1
      %p229 = scmp.eq.s32.totalorder %s28, 5
      %p230 = scmp.ne.s32.totalorder %s225, %s227
      %p231 = scmp.eq.s32.totalorder %s28, 0
      %p232 = por %p230, %p231
      %p233 = scmp.ne.s32.totalorder %s225, %s227
      %p234 = scmp.eq.s32.totalorder %s33, 5
      %p235 = por %p233, %p234
      %p236 = scmp.ne.s32.totalorder %s227, %s228
      %p237 = scmp.eq.s32.totalorder %s33, 0
      %p238 = por %p236, %p237
      %p239 = scmp.ne.s32.totalorder %s227, %s228
      %p240 = scmp.eq.s32.totalorder %s34, 5
      %p241 = por %p239, %p240
      %p243 = scmp.ne.s32.totalorder %s228, %s242
      %p244 = scmp.eq.s32.totalorder %s34, 0
      %p245 = por %p243, %p244
      %s247 = sadd.s32 %s246, 1
      %p250 = scmp.eq.s32.totalorder %s28, 5
      %p251 = scmp.ne.s32.totalorder %s246, %s248
      %p252 = scmp.eq.s32.totalorder %s28, 0
      %p253 = por %p251, %p252
      %p254 = scmp.ne.s32.totalorder %s246, %s248
      %p255 = scmp.eq.s32.totalorder %s33, 5
      %p256 = por %p254, %p255
      %p257 = scmp.ne.s32.totalorder %s248, %s249
      %p258 = scmp.eq.s32.totalorder %s33, 0
      %p259 = por %p257, %p258
      %p260 = scmp.ne.s32.totalorder %s248, %s249
      %p261 = scmp.eq.s32.totalorder %s34, 5
      %p262 = por %p260, %p261
      %p264 = scmp.ne.s32.totalorder %s249, %s263
      %p265 = scmp.eq.s32.totalorder %s34, 0
      %p266 = por %p264, %p265
      %s267 = ssub.s32 %s28, %s35
      %p268 = scmp.eq.s32.totalorder %s267, 0
      %s270 = sadd.s32 %s269, 1
      %s271 = scalar_select %p268, %s269, %s270
      %p274 = pneg %p268
      %p275 = scmp.eq.s32.totalorder %s28, 5
      %p276 = por %p274, %p275
      %p277 = scmp.ne.s32.totalorder %s269, %s272
      %p278 = scmp.eq.s32.totalorder %s28, 0
      %p279 = por %p277, %p278
      %p280 = scmp.ne.s32.totalorder %s269, %s272
      %p281 = scmp.eq.s32.totalorder %s33, 5
      %p282 = por %p280, %p281
      %p283 = scmp.ne.s32.totalorder %s272, %s273
      %p284 = scmp.eq.s32.totalorder %s33, 0
      %p285 = por %p283, %p284
      %p286 = scmp.ne.s32.totalorder %s272, %s273
      %p287 = scmp.eq.s32.totalorder %s34, 5
      %p288 = por %p286, %p287
      %p290 = scmp.ne.s32.totalorder %s273, %s289
      %p291 = scmp.eq.s32.totalorder %s34, 0
      %p292 = por %p290, %p291
      %s293 = ssub.s32 %s28, %s35
      %p294 = scmp.eq.s32.totalorder %s293, 0
      %s296 = sadd.s32 %s295, 1
      %s297 = scalar_select %p294, %s295, %s296
      %p300 = pneg %p294
      %p301 = scmp.eq.s32.totalorder %s28, 5
      %p302 = por %p300, %p301
      %p303 = scmp.ne.s32.totalorder %s295, %s298
      %p304 = scmp.eq.s32.totalorder %s28, 0
      %p305 = por %p303, %p304
      %p306 = scmp.ne.s32.totalorder %s295, %s298
      %p307 = scmp.eq.s32.totalorder %s33, 5
      %p308 = por %p306, %p307
      %p309 = scmp.ne.s32.totalorder %s298, %s299
      %p310 = scmp.eq.s32.totalorder %s33, 0
      %p311 = por %p309, %p310
      %p312 = scmp.ne.s32.totalorder %s298, %s299
      %p313 = scmp.eq.s32.totalorder %s34, 5
      %p314 = por %p312, %p313
      %p316 = scmp.ne.s32.totalorder %s299, %s315
      %p317 = scmp.eq.s32.totalorder %s34, 0
      %p318 = por %p316, %p317
      %s319 = ssub.s32 %s28, %s35
      %p320 = scmp.eq.s32.totalorder %s319, 0
      %s322 = sadd.s32 %s321, 1
      %s323 = scalar_select %p320, %s321, %s322
      %p326 = pneg %p320
      %p327 = scmp.eq.s32.totalorder %s28, 5
      %p328 = por %p326, %p327
      %p329 = scmp.ne.s32.totalorder %s321, %s324
      %p330 = scmp.eq.s32.totalorder %s28, 0
      %p331 = por %p329, %p330
      %p332 = scmp.ne.s32.totalorder %s321, %s324
      %p333 = scmp.eq.s32.totalorder %s33, 5
      %p334 = por %p332, %p333
      %p335 = scmp.ne.s32.totalorder %s324, %s325
      %p336 = scmp.eq.s32.totalorder %s33, 0
      %p337 = por %p335, %p336
      %p338 = scmp.ne.s32.totalorder %s324, %s325
      %p339 = scmp.eq.s32.totalorder %s34, 5
      %p340 = por %p338, %p339
      %p342 = scmp.ne.s32.totalorder %s325, %s341
      %p343 = scmp.eq.s32.totalorder %s34, 0
      %p344 = por %p342, %p343
      %p345 = scmp.le.s32.totalorder 1, %s28
      %p346 = scmp.lt.s32.totalorder %s28, 7
      %p347 = pnand %p345, %p346
      %p348 = pneg %p347
      // Predicated region
      $region9: #{tpu_custom_call.1} parent=5 // pred_check
        _
      $region10: #{tpu_custom_call.1} parent=5 // pred_check_branch
        %350 = sbr.rel (%p347) target = $region12
      $region11: #{tpu_custom_call.1} parent=5 // pred_region
        %s351 = ssub.s32 %s28, 1
        // Predicated region
        $region13: #{tpu_custom_call.1} parent=11 // pred_check
          %p352 = pneg %p49
        $region14: #{tpu_custom_call.1} parent=11 // pred_check_branch
          %354 = sbr.rel (%p352) target = $region16
        $region15: #{tpu_custom_call.1} parent=11 // pred_region
          _
        $region16: #{tpu_custom_call.1} parent=11 // pred_fallthru
          _
        // Predicated region
        $region17: #{tpu_custom_call.1} parent=11 // pred_check
          %p355 = pneg %p70
        $region18: #{tpu_custom_call.1} parent=11 // pred_check_branch
          %357 = sbr.rel (%p355) target = $region20
        $region19: #{tpu_custom_call.1} parent=11 // pred_region
          %s359 = ssub.s32 16, 16
          %360 = vsyncadd [#allocation3], %s359
          %s362 = sshll.u32 [#allocation2], 4
          %s363 = int_to_ptr.vmem [resolvable:$true] %s362
          %365 = dma.hbm_to_vmem [thread:$0]  %s1, 16, %s363, [#allocation3]
        $region20: #{tpu_custom_call.1} parent=11 // pred_fallthru
          _
        // Predicated region
        $region21: #{tpu_custom_call.1} parent=11 // pred_check
          %p366 = pneg %p91
        $region22: #{tpu_custom_call.1} parent=11 // pred_check_branch
          %368 = sbr.rel (%p366) target = $region24
        $region23: #{tpu_custom_call.1} parent=11 // pred_region
          %s370 = ssub.s32 16, 16
          %371 = vsyncadd [#allocation6], %s370
          %s373 = sshll.u32 [#allocation5], 4
          %s374 = int_to_ptr.vmem [resolvable:$true] %s373
          %376 = dma.hbm_to_vmem [thread:$0]  %s2, 16, %s374, [#allocation6]
        $region24: #{tpu_custom_call.1} parent=11 // pred_fallthru
          _
        // Predicated region
        $region25: #{tpu_custom_call.1} parent=11 // pred_check
          %p377 = pneg %p112
        $region26: #{tpu_custom_call.1} parent=11 // pred_check_branch
          %379 = sbr.rel (%p377) target = $region28
        $region27: #{tpu_custom_call.1} parent=11 // pred_region
          %s381 = ssub.s32 32, 32
          %382 = vsyncadd [#allocation6], %s381
          %s384 = sshll.u32 [#allocation7], 4
          %s385 = int_to_ptr.vmem [resolvable:$true] %s384
          %387 = dma.hbm_to_vmem [thread:$0]  %s3, 32, %s385, [#allocation6]
        $region28: #{tpu_custom_call.1} parent=11 // pred_fallthru
          _
        // Predicated region
        $region29: #{tpu_custom_call.1} parent=11 // pred_check
          %p388 = pneg %p133
        $region30: #{tpu_custom_call.1} parent=11 // pred_check_branch
          %390 = sbr.rel (%p388) target = $region32
        $region31: #{tpu_custom_call.1} parent=11 // pred_region
          %s392 = ssub.s32 16, 16
          %393 = vsyncadd [#allocation9], %s392
          %s395 = sshll.u32 [#allocation8], 4
          %s396 = int_to_ptr.vmem [resolvable:$true] %s395
          %398 = dma.hbm_to_vmem [thread:$0]  %s4, 16, %s396, [#allocation9]
        $region32: #{tpu_custom_call.1} parent=11 // pred_fallthru
          _
        // Predicated region
        $region33: #{tpu_custom_call.1} parent=11 // pred_check
          %p399 = pneg %p154
        $region34: #{tpu_custom_call.1} parent=11 // pred_check_branch
          %401 = sbr.rel (%p399) target = $region36
        $region35: #{tpu_custom_call.1} parent=11 // pred_region
          %s403 = ssub.s32 16, 16
          %404 = vsyncadd [#allocation9], %s403
          %s406 = sshll.u32 [#allocation10], 4
          %s407 = int_to_ptr.vmem [resolvable:$true] %s406
          %409 = dma.hbm_to_vmem [thread:$0]  %s5, 16, %s407, [#allocation9]
        $region36: #{tpu_custom_call.1} parent=11 // pred_fallthru
          _
        // Predicated region
        $region37: #{tpu_custom_call.1} parent=11 // pred_check
          %p410 = pneg %p175
        $region38: #{tpu_custom_call.1} parent=11 // pred_check_branch
          %412 = sbr.rel (%p410) target = $region40
        $region39: #{tpu_custom_call.1} parent=11 // pred_region
          %s414 = ssub.s32 16, 16
          %415 = vsyncadd [#allocation12], %s414
          %s417 = sshll.u32 [#allocation11], 4
          %s418 = int_to_ptr.vmem [resolvable:$true] %s417
          %420 = dma.hbm_to_vmem [thread:$0]  %s6, 16, %s418, [#allocation12]
        $region40: #{tpu_custom_call.1} parent=11 // pred_fallthru
          _
        // Predicated region
        $region41: #{tpu_custom_call.1} parent=11 // pred_check
          %p421 = pneg %p196
        $region42: #{tpu_custom_call.1} parent=11 // pred_check_branch
          %423 = sbr.rel (%p421) target = $region44
        $region43: #{tpu_custom_call.1} parent=11 // pred_region
          %s425 = ssub.s32 6656, 6656
          %426 = vsyncadd [#allocation12], %s425
          %s427 = sshll.u32 [#allocation13], 4
          %s428 = int_to_ptr.vmem [resolvable:$true] %s427
          %433 = dma.hbm_to_vmem [thread:$0]  %s7, 6656, %s428, [#allocation12], 512, 512, 32
        $region44: #{tpu_custom_call.1} parent=11 // pred_fallthru
          _
        // Predicated region
        $region45: #{tpu_custom_call.1} parent=11 // pred_check
          %p434 = pneg %p217
        $region46: #{tpu_custom_call.1} parent=11 // pred_check_branch
          %436 = sbr.rel (%p434) target = $region48
        $region47: #{tpu_custom_call.1} parent=11 // pred_region
          %s438 = ssub.s32 64, 64
          %439 = vsyncadd [#allocation15], %s438
          %s441 = sshll.u32 [#allocation14], 4
          %s442 = int_to_ptr.vmem [resolvable:$true] %s441
          %444 = dma.hbm_to_vmem [thread:$0]  %s8, 64, %s442, [#allocation15]
        $region48: #{tpu_custom_call.1} parent=11 // pred_fallthru
          _
        // Predicated region
        $region49: #{tpu_custom_call.1} parent=11 // pred_check
          %p445 = pneg %p238
        $region50: #{tpu_custom_call.1} parent=11 // pred_check_branch
          %447 = sbr.rel (%p445) target = $region52
        $region51: #{tpu_custom_call.1} parent=11 // pred_region
          %s449 = ssub.s32 64, 64
          %450 = vsyncadd [#allocation15], %s449
          %s452 = sshll.u32 [#allocation16], 4
          %s453 = int_to_ptr.vmem [resolvable:$true] %s452
          %455 = dma.hbm_to_vmem [thread:$0]  %s9, 64, %s453, [#allocation15]
        $region52: #{tpu_custom_call.1} parent=11 // pred_fallthru
          _
        // Predicated region
        $region53: #{tpu_custom_call.1} parent=11 // pred_check
          %p456 = pneg %p259
        $region54: #{tpu_custom_call.1} parent=11 // pred_check_branch
          %458 = sbr.rel (%p456) target = $region56
        $region55: #{tpu_custom_call.1} parent=11 // pred_region
          %s460 = ssub.s32 64, 64
          %461 = vsyncadd [#allocation18], %s460
          %s463 = sshll.u32 [#allocation17], 4
          %s464 = int_to_ptr.vmem [resolvable:$true] %s463
          %466 = dma.hbm_to_vmem [thread:$0]  %s10, 64, %s464, [#allocation18]
        $region56: #{tpu_custom_call.1} parent=11 // pred_fallthru
          _
      $region12: #{tpu_custom_call.1} parent=5 // pred_fallthru
        _
      %p467 = scmp.lt.s32.totalorder %s28, 6
      // Predicated region
      $region57: #{tpu_custom_call.1} parent=5 // pred_check
        %p468 = pneg %p467
      $region58: #{tpu_custom_call.1} parent=5 // pred_check_branch
        %470 = sbr.rel (%p468) target = $region60
      $region59: #{tpu_custom_call.1} parent=5 // pred_region
        // Predicated region
        $region61: #{tpu_custom_call.1} parent=59 // pred_check
          %p471 = pneg %p279
        $region62: #{tpu_custom_call.1} parent=59 // pred_check_branch
          %473 = sbr.rel (%p471) target = $region64
        $region63: #{tpu_custom_call.1} parent=59 // pred_region
          %s474 = sand.u32 %s28, 1
          %s475 = scalar_lea.sflag [#allocation3], %s474
          %s476 = sand.u32 %s269, 1
          %s477 = smul.addr %s476, 4032
          %s478 = scalar_lea.vmem [#allocation19], %s477
          %s479 = smul.u32 8, %s28
          %s481 = ssub.s32 64512, 64512
          %482 = vsyncadd %s475, %s481
          %s483 = smul.addr %s479, 128
          %s484 = scalar_lea.hbm %s11, %s483
          %s485 = sshll.u32 %s478, 4
          %s486 = int_to_ptr.vmem [resolvable:$true] %s485
          %491 = dma.hbm_to_vmem [thread:$0]  %s484, 64512, %s486, %s475, 6144, 1024, 64
        $region64: #{tpu_custom_call.1} parent=59 // pred_fallthru
          _
        // Predicated region
        $region65: #{tpu_custom_call.1} parent=59 // pred_check
          %p492 = pneg %p305
        $region66: #{tpu_custom_call.1} parent=59 // pred_check_branch
          %494 = sbr.rel (%p492) target = $region68
        $region67: #{tpu_custom_call.1} parent=59 // pred_region
          %s495 = sand.u32 %s28, 1
          %s496 = scalar_lea.sflag [#allocation3], %s495
          %s497 = sand.u32 %s295, 1
          %s498 = smul.addr %s497, 8
          %s499 = scalar_lea.vmem [#allocation20], %s498
          %s500 = smul.u32 8, %s28
          %s502 = ssub.s32 128, 128
          %503 = vsyncadd %s496, %s502
          %s504 = smul.addr %s500, 16
          %s505 = scalar_lea.hbm %s12, %s504
          %s507 = sshll.u32 %s499, 4
          %s508 = int_to_ptr.vmem [resolvable:$true] %s507
          %510 = dma.hbm_to_vmem [thread:$0]  %s505, 128, %s508, %s496
        $region68: #{tpu_custom_call.1} parent=59 // pred_fallthru
          _
      $region60: #{tpu_custom_call.1} parent=5 // pred_fallthru
        _
      %p511 = scmp.le.s32.totalorder 1, %s28
      %p512 = scmp.lt.s32.totalorder %s28, 7
      %p513 = pnand %p511, %p512
      %p514 = pneg %p513
      // Predicated region
      $region69: #{tpu_custom_call.1} parent=5 // pred_check
        _
      $region70: #{tpu_custom_call.1} parent=5 // pred_check_branch
        %516 = sbr.rel (%p513) target = $region72
      $region71: #{tpu_custom_call.1} parent=5 // pred_region
        %s517 = ssub.s32 %s28, 1
        // Predicated region
        $region73: #{tpu_custom_call.1} parent=71 // pred_check
          %p518 = pneg %p70
        $region74: #{tpu_custom_call.1} parent=71 // pred_check_branch
          %520 = sbr.rel (%p518) target = $region76
        $region75: #{tpu_custom_call.1} parent=71 // pred_region
          %521 = dma.done [#allocation3], 16
        $region76: #{tpu_custom_call.1} parent=71 // pred_fallthru
          _
        // Predicated region
        $region77: #{tpu_custom_call.1} parent=71 // pred_check
          %p522 = pneg %p91
        $region78: #{tpu_custom_call.1} parent=71 // pred_check_branch
          %524 = sbr.rel (%p522) target = $region80
        $region79: #{tpu_custom_call.1} parent=71 // pred_region
          %525 = dma.done [#allocation6], 16
        $region80: #{tpu_custom_call.1} parent=71 // pred_fallthru
          _
        // Predicated region
        $region81: #{tpu_custom_call.1} parent=71 // pred_check
          %p526 = pneg %p112
        $region82: #{tpu_custom_call.1} parent=71 // pred_check_branch
          %528 = sbr.rel (%p526) target = $region84
        $region83: #{tpu_custom_call.1} parent=71 // pred_region
          %529 = dma.done [#allocation6], 32
        $region84: #{tpu_custom_call.1} parent=71 // pred_fallthru
          _
        // Predicated region
        $region85: #{tpu_custom_call.1} parent=71 // pred_check
          %p530 = pneg %p133
        $region86: #{tpu_custom_call.1} parent=71 // pred_check_branch
          %532 = sbr.rel (%p530) target = $region88
        $region87: #{tpu_custom_call.1} parent=71 // pred_region
          %533 = dma.done [#allocation9], 16
        $region88: #{tpu_custom_call.1} parent=71 // pred_fallthru
          _
        // Predicated region
        $region89: #{tpu_custom_call.1} parent=71 // pred_check
          %p534 = pneg %p154
        $region90: #{tpu_custom_call.1} parent=71 // pred_check_branch
          %536 = sbr.rel (%p534) target = $region92
        $region91: #{tpu_custom_call.1} parent=71 // pred_region
          %537 = dma.done [#allocation9], 16
        $region92: #{tpu_custom_call.1} parent=71 // pred_fallthru
          _
        // Predicated region
        $region93: #{tpu_custom_call.1} parent=71 // pred_check
          %p538 = pneg %p175
        $region94: #{tpu_custom_call.1} parent=71 // pred_check_branch
          %540 = sbr.rel (%p538) target = $region96
        $region95: #{tpu_custom_call.1} parent=71 // pred_region
          %541 = dma.done [#allocation12], 16
        $region96: #{tpu_custom_call.1} parent=71 // pred_fallthru
          _
        // Predicated region
        $region97: #{tpu_custom_call.1} parent=71 // pred_check
          %p542 = pneg %p196
        $region98: #{tpu_custom_call.1} parent=71 // pred_check_branch
          %544 = sbr.rel (%p542) target = $region100
        $region99: #{tpu_custom_call.1} parent=71 // pred_region
          %545 = dma.done [#allocation12], 6656
        $region100: #{tpu_custom_call.1} parent=71 // pred_fallthru
          _
        // Predicated region
        $region101: #{tpu_custom_call.1} parent=71 // pred_check
          %p546 = pneg %p217
        $region102: #{tpu_custom_call.1} parent=71 // pred_check_branch
          %548 = sbr.rel (%p546) target = $region104
        $region103: #{tpu_custom_call.1} parent=71 // pred_region
          %549 = dma.done [#allocation15], 64
        $region104: #{tpu_custom_call.1} parent=71 // pred_fallthru
          _
        // Predicated region
        $region105: #{tpu_custom_call.1} parent=71 // pred_check
          %p550 = pneg %p238
        $region106: #{tpu_custom_call.1} parent=71 // pred_check_branch
          %552 = sbr.rel (%p550) target = $region108
        $region107: #{tpu_custom_call.1} parent=71 // pred_region
          %553 = dma.done [#allocation15], 64
        $region108: #{tpu_custom_call.1} parent=71 // pred_fallthru
          _
        // Predicated region
        $region109: #{tpu_custom_call.1} parent=71 // pred_check
          %p554 = pneg %p259
        $region110: #{tpu_custom_call.1} parent=71 // pred_check_branch
          %556 = sbr.rel (%p554) target = $region112
        $region111: #{tpu_custom_call.1} parent=71 // pred_region
          %557 = dma.done [#allocation18], 64
        $region112: #{tpu_custom_call.1} parent=71 // pred_fallthru
          _
        %s558 = sand.u32 %s33, 1
        %s559 = scalar_lea.sflag [#allocation3], %s558
        %s560 = sand.u32 %s272, 1
        %s561 = smul.addr %s560, 4032
        %s562 = scalar_lea.vmem [#allocation19], %s561
        // Predicated region
        $region113: #{tpu_custom_call.1} parent=71 // pred_check
          %p563 = pneg %p285
        $region114: #{tpu_custom_call.1} parent=71 // pred_check_branch
          %565 = sbr.rel (%p563) target = $region116
        $region115: #{tpu_custom_call.1} parent=71 // pred_region
          %566 = dma.done %s559, 64512
        $region116: #{tpu_custom_call.1} parent=71 // pred_fallthru
          _
        %s567 = sand.u32 %s33, 1
        %s568 = scalar_lea.sflag [#allocation3], %s567
        %s569 = sand.u32 %s298, 1
        %s570 = smul.addr %s569, 8
        %s571 = scalar_lea.vmem [#allocation20], %s570
        // Predicated region
        $region117: #{tpu_custom_call.1} parent=71 // pred_check
          %p572 = pneg %p311
        $region118: #{tpu_custom_call.1} parent=71 // pred_check_branch
          %574 = sbr.rel (%p572) target = $region120
        $region119: #{tpu_custom_call.1} parent=71 // pred_region
          %575 = dma.done %s568, 128
        $region120: #{tpu_custom_call.1} parent=71 // pred_fallthru
          _
        %p576 = pneg %p49
        %p577 = pneg %p46
        %p578 = pneg %p70
        %p579 = pneg %p67
        %p580 = pneg %p91
        %p581 = pneg %p88
        %p582 = pneg %p112
        %p583 = pneg %p109
        %p584 = pneg %p133
        %p585 = pneg %p130
        %p586 = pneg %p154
        %p587 = pneg %p151
        %p588 = pneg %p175
        %p589 = pneg %p172
        %p590 = pneg %p196
        %p591 = pneg %p193
        %p592 = pneg %p217
        %p593 = pneg %p214
        %p594 = pneg %p238
        %p595 = pneg %p235
        %p596 = pneg %p259
        %p597 = pneg %p256
        %s598 = sand.u32 %s33, 1
        %s599 = scalar_lea.sflag [#allocation3], %s598
        %s600 = sand.u32 %s272, 1
        %s601 = smul.addr %s600, 4032
        %s602 = scalar_lea.vmem [#allocation19], %s601
        %p603 = pneg %p285
        %p604 = pneg %p282
        %s605 = sand.u32 %s33, 1
        %s606 = scalar_lea.sflag [#allocation3], %s605
        %s607 = sand.u32 %s298, 1
        %s608 = smul.addr %s607, 8
        %s609 = scalar_lea.vmem [#allocation20], %s608
        %p610 = pneg %p311
        %p611 = pneg %p308
        %p612 = pneg %p337
        %p613 = pneg %p334
        %s614 = sand.u32 %s324, 1
        %s615 = scalar_lea.sflag [#allocation4], %s614
        %s616 = sand.u32 %s324, 1
        %s617 = smul.addr %s616, 128
        %s618 = scalar_lea.vmem [#allocation21], %s617
        %s619 = smul.u32 8, %s33
        %s620 = smul.u32 8, %s33
        %s621 = smul.u32 8, %s33
        %v622 = vld [vmem:[%s0] sm:$0xff]
        %v623 = vld [vmem:[%s0 + $0x8] sm:$0xff]
        %v624 = vld [vmem:[#allocation2] sm:$0x1]
        %v625 = vld [vmem:[#allocation5] sm:$0x1]
        %vm626 = vcmask 15360
        %v627 = vsel %vm626, %v622, 0.0
        %v628 = vsel %vm626, %v623, 0.0
        %v629 = vadd.f32 %v627, %v628
        %v630 = vrot.slane %v629, 4
        %v631 = vadd.f32 %v629, %v630
        %v632 = vrot.slane %v631, 2
        %v633 = vadd.f32 %v631, %v632
        %v634 = vrot.slane %v633, 1
        %v635 = vadd.f32 %v633, %v634
        %v636 = vrcp.pop 16.0
        %v637 = vmul.f32 %v635, %v636
        %v638 = vsub.f32 %v622, %v637
        %v639 = vsub.f32 %v623, %v637
        %v640 = vmul.f32 %v638, %v638
        %v641 = vmul.f32 %v639, %v639
        %v642 = vsel %vm626, %v640, 0.0
        %v643 = vsel %vm626, %v641, 0.0
        %v644 = vadd.f32 %v642, %v643
        %v645 = vrot.slane %v644, 4
        %v646 = vadd.f32 %v644, %v645
        %v647 = vrot.slane %v646, 2
        %v648 = vadd.f32 %v646, %v647
        %v649 = vrot.slane %v648, 1
        %v650 = vadd.f32 %v648, %v649
        %v651 = vmul.f32 %v650, %v636
        %v652 = vadd.f32 %v651, 1e-05
        %v653 = vrsqrt.pop %v652
        %v654 = vmul.f32 %v638, %v653
        %v655 = vmul.f32 %v639, %v653
        %v657 = vlaneseq
        %v658 = vshrl.u32 %v657, 7
        %v659 = vsub.s32 0, %v658
        %v660 = vrot.slane %v624, %v659
        %v662 = vmul.f32 %v654, %v660
        %v663 = vmul.f32 %v655, %v660
        %v665 = vlaneseq
        %v666 = vshrl.u32 %v665, 7
        %v667 = vsub.s32 0, %v666
        %v668 = vrot.slane %v625, %v667
        %v670 = vadd.f32 %v662, %v668
        %v671 = vadd.f32 %v663, %v668
        %v672 = vld [vmem:[#allocation7] sm:$0x3]
        %674 = vset.pattern.permute.xlu0 0
        %675 = vperm.xlu0 %674, %v670
        %v676 = vpop.permute.xlu0 %675
        %679 = vset.pattern.permute.xlu0 0
        %680 = vperm.xlu0 %679, %v671
        %v681 = vpop.permute.xlu0 %680
        %v683 = vlaneseq
        %v684 = vshrl.u32 %v683, 7
        %v685 = vsub.s32 0, %v684
        %v686 = vrot.slane %v672, %v685
        %v687 = vmul.f32 %v676, %v686
        %v688 = vmul.f32 %v681, %v686
        %689 = vset.pattern.permute.xlu0 1
        %690 = vperm.xlu0 %689, %v670
        %v691 = vpop.permute.xlu0 %690
        %693 = vset.pattern.permute.xlu0 1
        %694 = vperm.xlu0 %693, %v671
        %v695 = vpop.permute.xlu0 %694
        %v697 = vlaneseq
        %v698 = vshrl.u32 %v697, 7
        %v699 = vsub.s32 1, %v698
        %v700 = vrot.slane %v672, %v699
        %v701 = vmul.f32 %v691, %v700
        %v702 = vmul.f32 %v695, %v700
        %v703 = vadd.f32 %v687, %v701
        %v704 = vadd.f32 %v688, %v702
        %v705 = vld [vmem:[#allocation8] sm:$0x1]
        %v707 = vlaneseq
        %v708 = vshrl.u32 %v707, 7
        %v709 = vsub.s32 0, %v708
        %v710 = vrot.slane %v705, %v709
        %v712 = vadd.f32 %v703, %v710
        %v713 = vadd.f32 %v704, %v710
        %v714 = vmax.f32 %v712, 0.0
        %v715 = vmax.f32 %v713, 0.0
        %v716 = vld [vmem:[#allocation10] sm:$0x1]
        %v717 = vld [vmem:[#allocation11] sm:$0x1]
        %vm718 = vcmask 818176
        %v719 = vsel %vm718, %v714, 0.0
        %v720 = vsel %vm718, %v715, 0.0
        %v721 = vadd.f32 %v719, %v720
        %v722 = vrot.slane %v721, 4
        %v723 = vadd.f32 %v721, %v722
        %v724 = vrot.slane %v723, 2
        %v725 = vadd.f32 %v723, %v724
        %v726 = vrot.slane %v725, 1
        %v727 = vadd.f32 %v725, %v726
        %v728 = vmul.f32 %v727, %v636
        %v729 = vsub.f32 %v714, %v728
        %v730 = vsub.f32 %v715, %v728
        %v731 = vmul.f32 %v729, %v729
        %v732 = vmul.f32 %v730, %v730
        %v733 = vsel %vm718, %v731, 0.0
        %v734 = vsel %vm718, %v732, 0.0
        %v735 = vadd.f32 %v733, %v734
        %v736 = vrot.slane %v735, 4
        %v737 = vadd.f32 %v735, %v736
        %v738 = vrot.slane %v737, 2
        %v739 = vadd.f32 %v737, %v738
        %v740 = vrot.slane %v739, 1
        %v741 = vadd.f32 %v739, %v740
        %v742 = vmul.f32 %v741, %v636
        %v743 = vadd.f32 %v742, 1e-05
        %v744 = vrsqrt.pop %v743
        %v745 = vmul.f32 %v729, %v744
        %v746 = vmul.f32 %v730, %v744
        %v748 = vlaneseq
        %v749 = vshrl.u32 %v748, 7
        %v750 = vsub.s32 0, %v749
        %v751 = vrot.slane %v716, %v750
        %v753 = vmul.f32 %v745, %v751
        %v754 = vmul.f32 %v746, %v751
        %v756 = vlaneseq
        %v757 = vshrl.u32 %v756, 7
        %v758 = vsub.s32 0, %v757
        %v759 = vrot.slane %v717, %v758
        %v761 = vadd.f32 %v753, %v759
        %v762 = vadd.f32 %v754, %v759
        %v763 = vld [vmem:[#allocation13] sm:$0xff]
        %v764 = vld [vmem:[#allocation13 + $0x8] sm:$0xff]
        %v765 = vld [vmem:[#allocation13 + $0x10] sm:$0xff]
        %v766 = vld [vmem:[#allocation13 + $0x18] sm:$0xff]
        %v767 = vld [vmem:[#allocation13 + $0x20] sm:$0xff]
        %v768 = vld [vmem:[#allocation13 + $0x28] sm:$0xff]
        %v769 = vld [vmem:[#allocation13 + $0x30] sm:$0xff]
        %v770 = vld [vmem:[#allocation13 + $0x38] sm:$0xff]
        %v771 = vld [vmem:[#allocation13 + $0x40] sm:$0xff]
        %v772 = vld [vmem:[#allocation13 + $0x48] sm:$0xff]
        %v773 = vld [vmem:[#allocation13 + $0x50] sm:$0xff]
        %v774 = vld [vmem:[#allocation13 + $0x58] sm:$0xff]
        %v775 = vld [vmem:[#allocation13 + $0x60] sm:$0xff]
        %v776 = vld [vmem:[#allocation13 + $0x68] sm:$0xff]
        %v777 = vld [vmem:[#allocation13 + $0x70] sm:$0xff]
        %v778 = vld [vmem:[#allocation13 + $0x78] sm:$0xff]
        %v779 = vld [vmem:[#allocation13 + $0x80] sm:$0xff]
        %v780 = vld [vmem:[#allocation13 + $0x88] sm:$0xff]
        %v781 = vld [vmem:[#allocation13 + $0x90] sm:$0xff]
        %v782 = vld [vmem:[#allocation13 + $0x98] sm:$0xff]
        %v783 = vld [vmem:[#allocation13 + $0xa0] sm:$0xff]
        %v784 = vld [vmem:[#allocation13 + $0xa8] sm:$0xff]
        %v785 = vld [vmem:[#allocation13 + $0xb0] sm:$0xff]
        %v786 = vld [vmem:[#allocation13 + $0xb8] sm:$0xff]
        %v787 = vld [vmem:[#allocation13 + $0xc0] sm:$0xff]
        %v788 = vld [vmem:[#allocation13 + $0xc8] sm:$0xff]
        %v789 = vld [vmem:[#allocation13 + $0xd0] sm:$0xff]
        %v790 = vld [vmem:[#allocation13 + $0xd8] sm:$0xff]
        %v791 = vld [vmem:[#allocation13 + $0xe0] sm:$0xff]
        %v792 = vld [vmem:[#allocation13 + $0xe8] sm:$0xff]
        %v793 = vld [vmem:[#allocation13 + $0xf0] sm:$0xff]
        %v794 = vld [vmem:[#allocation13 + $0xf8] sm:$0xff]
        %v795 = vld [vmem:[#allocation13 + $0x100] sm:$0xff]
        %v796 = vld [vmem:[#allocation13 + $0x108] sm:$0xff]
        %v797 = vld [vmem:[#allocation13 + $0x110] sm:$0xff]
        %v798 = vld [vmem:[#allocation13 + $0x118] sm:$0xff]
        %v799 = vld [vmem:[#allocation13 + $0x120] sm:$0xff]
        %v800 = vld [vmem:[#allocation13 + $0x128] sm:$0xff]
        %v801 = vld [vmem:[#allocation13 + $0x130] sm:$0xff]
        %v802 = vld [vmem:[#allocation13 + $0x138] sm:$0xff]
        %v803 = vld [vmem:[#allocation13 + $0x140] sm:$0xff]
        %v804 = vld [vmem:[#allocation13 + $0x148] sm:$0xff]
        %v805 = vld [vmem:[#allocation13 + $0x150] sm:$0xff]
        %v806 = vld [vmem:[#allocation13 + $0x158] sm:$0xff]
        %v807 = vld [vmem:[#allocation13 + $0x160] sm:$0xff]
        %v808 = vld [vmem:[#allocation13 + $0x168] sm:$0xff]
        %v809 = vld [vmem:[#allocation13 + $0x170] sm:$0xff]
        %v810 = vld [vmem:[#allocation13 + $0x178] sm:$0xff]
        %v811 = vld [vmem:[#allocation13 + $0x180] sm:$0xf]
        %v812 = vld [vmem:[#allocation13 + $0x188] sm:$0xf]
        %v813 = vld [vmem:[#allocation13 + $0x190] sm:$0xf]
        %v814 = vld [vmem:[#allocation13 + $0x198] sm:$0xf]
        %v815 = vld [vmem:[#allocation14] sm:$0xf]
        %v817 = vlaneseq
        %v818 = vshrl.u32 %v817, 7
        %v819 = vsub.s32 0, %v818
        %v820 = vrot.slane %v815, %v819
        %v821 = vlaneseq
        %v822 = vshrl.u32 %v821, 7
        %v823 = vsub.s32 1, %v822
        %v824 = vrot.slane %v815, %v823
        %v825 = vlaneseq
        %v826 = vshrl.u32 %v825, 7
        %v827 = vsub.s32 2, %v826
        %v828 = vrot.slane %v815, %v827
        %v829 = vlaneseq
        %v830 = vshrl.u32 %v829, 7
        %v831 = vsub.s32 3, %v830
        %v832 = vrot.slane %v815, %v831
        %v838 = vsel %vm718, %v761, 0
        %v841 = vsel %vm718, %v762, 0
        %vm843 = vcmask 1043456
        %v845 = vsel %vm843, %v811, 0
        %v848 = vsel %vm843, %v812, 0
        %v851 = vsel %vm843, %v813, 0
        %v854 = vsel %vm843, %v814, 0
        %856 = vmatprep.subr.mxu0 %v764
        %857 = vmatpush1.msra.mxu0 %v763
        %858 = vmatprep.subr.mxu0 %v768
        %859 = vmatpush1.msra.mxu0 %v767
        %860 = vmatprep.subr.mxu0 %v772
        %861 = vmatpush1.msra.mxu0 %v771
        %862 = vmatprep.subr.mxu0 %v776
        %863 = vmatpush1.msra.mxu0 %v775
        %864 = vmatprep.subr.mxu0 %v780
        %865 = vmatpush1.msra.mxu0 %v779
        %866 = vmatprep.subr.mxu0 %v784
        %867 = vmatpush1.msra.mxu0 %v783
        %868 = vmatprep.subr.mxu0 %v788
        %869 = vmatpush1.msra.mxu0 %v787
        %870 = vmatprep.subr.mxu0 %v792
        %871 = vmatpush1.msra.mxu0 %v791
        %872 = vmatprep.subr.mxu0 %v796
        %873 = vmatpush1.msra.mxu0 %v795
        %874 = vmatprep.subr.mxu0 %v800
        %875 = vmatpush1.msra.mxu0 %v799
        %876 = vmatprep.subr.mxu0 %v804
        %877 = vmatpush1.msra.mxu0 %v803
        %878 = vmatprep.subr.mxu0 %v808
        %879 = vmatpush1.msra.mxu0 %v807
        %880 = vmatprep.subr.mxu0 %v848
        %881 = vmatpush1.msra.mxu0 %v845
        %882 = vmatprep.subr.mxu0 0.0
        %883 = vmatpush1.msra.mxu0 0.0
        %884 = vmatprep.subr.mxu0 0.0
        %885 = vmatpush1.msra.mxu0 0.0
        %886 = vmatprep.subr.mxu0 0.0
        %887 = vmatpush1.msra.mxu0 0.0
        %888 = vmatprep.subr.mxu0 0.0
        %889 = vmatpush1.msra.mxu0 0.0
        %890 = vmatprep.subr.mxu0 0.0
        %891 = vmatpush1.msra.mxu0 0.0
        %892 = vmatprep.subr.mxu0 0.0
        %893 = vmatpush1.msra.mxu0 0.0
        %894 = vmatprep.subr.mxu0 0.0
        %895 = vmatpush1.msra.mxu0 0.0
        %896 = vmatprep.subr.mxu0 0.0
        %897 = vmatpush1.msra.mxu0 0.0
        %898 = vmatprep.subr.mxu0 0.0
        %899 = vmatpush1.msra.mxu0 0.0
        %900 = vmatprep.subr.mxu0 0.0
        %901 = vmatpush1.msra.mxu0 0.0
        %902 = vmatprep.subr.mxu0 0.0
        %903 = vmatpush1.msra.mxu0 0.0
        %904 = vmatprep.subr.mxu0 0.0
        %905 = vmatpush1.msra.mxu0 0.0
        %906 = vmatprep.subr.mxu0 0.0
        %907 = vmatpush1.msra.mxu0 0.0
        %908 = vmatprep.subr.mxu0 0.0
        %909 = vmatpush1.msra.mxu0 0.0
        %910 = vmatprep.subr.mxu0 0.0
        %911 = vmatpush1.msra.mxu0 0.0
        %912 = vmatprep.subr.mxu0 0.0
        %913 = vmatpush1.msra.mxu0 0.0
        %914 = vmatprep.subr.mxu0 0.0
        %915 = vmatpush1.msra.mxu0 0.0
        %916 = vmatprep.subr.mxu0 0.0
        %917 = vmatpush1.msra.mxu0 0.0
        %918 = vmatprep.subr.mxu0 0.0
        %919 = vmatpush1.msra.mxu0 0.0
        %920 = vmatprep.mubr.f32.mxu0 0.0
        %921 = vmatmul.mubr.f32.gmra.mrb[0].mxu0 %v838
        %v922 = vpop.f32.mrb[0].mxu0
        %v923 = vadd.f32 %v820, %v922
        %v924 = vpop.f32.mrb[0].mxu0
        %v925 = vadd.f32 %v824, %v924
        %926 = vmatprep.mubr.f32.mxu0 0.0
        %927 = vmatmul.mubr.f32.gmra.mrb[0].mxu0 %v841
        %v928 = vpop.f32.mrb[0].mxu0
        %v929 = vadd.f32 %v820, %v928
        %v930 = vpop.f32.mrb[0].mxu0
        %v931 = vadd.f32 %v824, %v930
        %932 = vdwg.mxu0
        %933 = vmatprep.subr.mxu0 %v766
        %934 = vmatpush1.msra.mxu0 %v765
        %935 = vmatprep.subr.mxu0 %v770
        %936 = vmatpush1.msra.mxu0 %v769
        %937 = vmatprep.subr.mxu0 %v774
        %938 = vmatpush1.msra.mxu0 %v773
        %939 = vmatprep.subr.mxu0 %v778
        %940 = vmatpush1.msra.mxu0 %v777
        %941 = vmatprep.subr.mxu0 %v782
        %942 = vmatpush1.msra.mxu0 %v781
        %943 = vmatprep.subr.mxu0 %v786
        %944 = vmatpush1.msra.mxu0 %v785
        %945 = vmatprep.subr.mxu0 %v790
        %946 = vmatpush1.msra.mxu0 %v789
        %947 = vmatprep.subr.mxu0 %v794
        %948 = vmatpush1.msra.mxu0 %v793
        %949 = vmatprep.subr.mxu0 %v798
        %950 = vmatpush1.msra.mxu0 %v797
        %951 = vmatprep.subr.mxu0 %v802
        %952 = vmatpush1.msra.mxu0 %v801
        %953 = vmatprep.subr.mxu0 %v806
        %954 = vmatpush1.msra.mxu0 %v805
        %955 = vmatprep.subr.mxu0 %v810
        %956 = vmatpush1.msra.mxu0 %v809
        %957 = vmatprep.subr.mxu0 %v854
        %958 = vmatpush1.msra.mxu0 %v851
        %959 = vmatprep.subr.mxu0 0.0
        %960 = vmatpush1.msra.mxu0 0.0
        %961 = vmatprep.subr.mxu0 0.0
        %962 = vmatpush1.msra.mxu0 0.0
        %963 = vmatprep.subr.mxu0 0.0
        %964 = vmatpush1.msra.mxu0 0.0
        %965 = vmatprep.subr.mxu0 0.0
        %966 = vmatpush1.msra.mxu0 0.0
        %967 = vmatprep.subr.mxu0 0.0
        %968 = vmatpush1.msra.mxu0 0.0
        %969 = vmatprep.subr.mxu0 0.0
        %970 = vmatpush1.msra.mxu0 0.0
        %971 = vmatprep.subr.mxu0 0.0
        %972 = vmatpush1.msra.mxu0 0.0
        %973 = vmatprep.subr.mxu0 0.0
        %974 = vmatpush1.msra.mxu0 0.0
        %975 = vmatprep.subr.mxu0 0.0
        %976 = vmatpush1.msra.mxu0 0.0
        %977 = vmatprep.subr.mxu0 0.0
        %978 = vmatpush1.msra.mxu0 0.0
        %979 = vmatprep.subr.mxu0 0.0
        %980 = vmatpush1.msra.mxu0 0.0
        %981 = vmatprep.subr.mxu0 0.0
        %982 = vmatpush1.msra.mxu0 0.0
        %983 = vmatprep.subr.mxu0 0.0
        %984 = vmatpush1.msra.mxu0 0.0
        %985 = vmatprep.subr.mxu0 0.0
        %986 = vmatpush1.msra.mxu0 0.0
        %987 = vmatprep.subr.mxu0 0.0
        %988 = vmatpush1.msra.mxu0 0.0
        %989 = vmatprep.subr.mxu0 0.0
        %990 = vmatpush1.msra.mxu0 0.0
        %991 = vmatprep.subr.mxu0 0.0
        %992 = vmatpush1.msra.mxu0 0.0
        %993 = vmatprep.subr.mxu0 0.0
        %994 = vmatpush1.msra.mxu0 0.0
        %995 = vmatprep.subr.mxu0 0.0
        %996 = vmatpush1.msra.mxu0 0.0
        %997 = vmatprep.mubr.f32.mxu0 0.0
        %998 = vmatmul.mubr.f32.gmra.mrb[0].mxu0 %v838
        %v999 = vpop.f32.mrb[0].mxu0
        %v1000 = vadd.f32 %v828, %v999
        %v1001 = vpop.f32.mrb[0].mxu0
        %v1002 = vadd.f32 %v832, %v1001
        %1003 = vmatprep.mubr.f32.mxu0 0.0
        %1004 = vmatmul.mubr.f32.gmra.mrb[0].mxu0 %v841
        %v1005 = vpop.f32.mrb[0].mxu0
        %v1006 = vadd.f32 %v828, %v1005
        %v1007 = vpop.f32.mrb[0].mxu0
        %v1008 = vadd.f32 %v832, %v1007
        %1009 = vdwg.mxu0
        %v1010 = vmax.f32 %v923, 0.0
        %v1011 = vmax.f32 %v925, 0.0
        %v1012 = vmax.f32 %v1000, 0.0
        %v1013 = vmax.f32 %v1002, 0.0
        %v1014 = vmax.f32 %v929, 0.0
        %v1015 = vmax.f32 %v931, 0.0
        %v1016 = vmax.f32 %v1006, 0.0
        %v1017 = vmax.f32 %v1008, 0.0
        %v1018 = vld [vmem:[#allocation16] sm:$0xf]
        %v1019 = vld [vmem:[#allocation17] sm:$0xf]
        %v1020 = vadd.f32 %v1010, %v1014
        %v1021 = vrot.slane %v1020, 4
        %v1022 = vadd.f32 %v1020, %v1021
        %v1023 = vrot.slane %v1022, 2
        %v1024 = vadd.f32 %v1022, %v1023
        %v1025 = vrot.slane %v1024, 1
        %v1026 = vadd.f32 %v1024, %v1025
        %v1027 = vadd.f32 %v1011, %v1015
        %v1028 = vrot.slane %v1027, 4
        %v1029 = vadd.f32 %v1027, %v1028
        %v1030 = vrot.slane %v1029, 2
        %v1031 = vadd.f32 %v1029, %v1030
        %v1032 = vrot.slane %v1031, 1
        %v1033 = vadd.f32 %v1031, %v1032
        %v1034 = vadd.f32 %v1012, %v1016
        %v1035 = vrot.slane %v1034, 4
        %v1036 = vadd.f32 %v1034, %v1035
        %v1037 = vrot.slane %v1036, 2
        %v1038 = vadd.f32 %v1036, %v1037
        %v1039 = vrot.slane %v1038, 1
        %v1040 = vadd.f32 %v1038, %v1039
        %vm1041 = vcmask 949248
        %v1042 = vsel %vm1041, %v1013, 0.0
        %v1043 = vsel %vm1041, %v1017, 0.0
        %v1044 = vadd.f32 %v1042, %v1043
        %v1045 = vrot.slane %v1044, 4
        %v1046 = vadd.f32 %v1044, %v1045
        %v1047 = vrot.slane %v1046, 2
        %v1048 = vadd.f32 %v1046, %v1047
        %v1049 = vrot.slane %v1048, 1
        %v1050 = vadd.f32 %v1048, %v1049
        %v1051 = vmul.f32 %v1026, %v636
        %v1052 = vmul.f32 %v1033, %v636
        %v1053 = vmul.f32 %v1040, %v636
        %v1054 = vmul.f32 %v1050, %v636
        %v1055 = vsub.f32 %v1010, %v1051
        %v1056 = vsub.f32 %v1011, %v1052
        %v1057 = vsub.f32 %v1012, %v1053
        %v1058 = vsub.f32 %v1013, %v1054
        %v1059 = vsub.f32 %v1014, %v1051
        %v1060 = vsub.f32 %v1015, %v1052
        %v1061 = vsub.f32 %v1016, %v1053
        %v1062 = vsub.f32 %v1017, %v1054
        %v1063 = vmul.f32 %v1055, %v1055
        %v1064 = vmul.f32 %v1056, %v1056
        %v1065 = vmul.f32 %v1057, %v1057
        %v1066 = vmul.f32 %v1058, %v1058
        %v1067 = vmul.f32 %v1059, %v1059
        %v1068 = vmul.f32 %v1060, %v1060
        %v1069 = vmul.f32 %v1061, %v1061
        %v1070 = vmul.f32 %v1062, %v1062
        %v1071 = vadd.f32 %v1063, %v1067
        %v1072 = vrot.slane %v1071, 4
        %v1073 = vadd.f32 %v1071, %v1072
        %v1074 = vrot.slane %v1073, 2
        %v1075 = vadd.f32 %v1073, %v1074
        %v1076 = vrot.slane %v1075, 1
        %v1077 = vadd.f32 %v1075, %v1076
        %v1078 = vadd.f32 %v1064, %v1068
        %v1079 = vrot.slane %v1078, 4
        %v1080 = vadd.f32 %v1078, %v1079
        %v1081 = vrot.slane %v1080, 2
        %v1082 = vadd.f32 %v1080, %v1081
        %v1083 = vrot.slane %v1082, 1
        %v1084 = vadd.f32 %v1082, %v1083
        %v1085 = vadd.f32 %v1065, %v1069
        %v1086 = vrot.slane %v1085, 4
        %v1087 = vadd.f32 %v1085, %v1086
        %v1088 = vrot.slane %v1087, 2
        %v1089 = vadd.f32 %v1087, %v1088
        %v1090 = vrot.slane %v1089, 1
        %v1091 = vadd.f32 %v1089, %v1090
        %v1092 = vsel %vm1041, %v1066, 0.0
        %v1093 = vsel %vm1041, %v1070, 0.0
        %v1094 = vadd.f32 %v1092, %v1093
        %v1095 = vrot.slane %v1094, 4
        %v1096 = vadd.f32 %v1094, %v1095
        %v1097 = vrot.slane %v1096, 2
        %v1098 = vadd.f32 %v1096, %v1097
        %v1099 = vrot.slane %v1098, 1
        %v1100 = vadd.f32 %v1098, %v1099
        %v1101 = vmul.f32 %v1077, %v636
        %v1102 = vmul.f32 %v1084, %v636
        %v1103 = vmul.f32 %v1091, %v636
        %v1104 = vmul.f32 %v1100, %v636
        %v1105 = vadd.f32 %v1101, 1e-05
        %v1106 = vadd.f32 %v1102, 1e-05
        %v1107 = vadd.f32 %v1103, 1e-05
        %v1108 = vadd.f32 %v1104, 1e-05
        %v1109 = vrsqrt.pop %v1105
        %v1110 = vrsqrt.pop %v1106
        %v1111 = vrsqrt.pop %v1107
        %v1112 = vrsqrt.pop %v1108
        %v1113 = vmul.f32 %v1055, %v1109
        %v1114 = vmul.f32 %v1056, %v1110
        %v1115 = vmul.f32 %v1057, %v1111
        %v1116 = vmul.f32 %v1058, %v1112
        %v1117 = vmul.f32 %v1059, %v1109
        %v1118 = vmul.f32 %v1060, %v1110
        %v1119 = vmul.f32 %v1061, %v1111
        %v1120 = vmul.f32 %v1062, %v1112
        %v1122 = vlaneseq
        %v1123 = vshrl.u32 %v1122, 7
        %v1124 = vsub.s32 0, %v1123
        %v1125 = vrot.slane %v1018, %v1124
        %v1126 = vlaneseq
        %v1127 = vshrl.u32 %v1126, 7
        %v1128 = vsub.s32 1, %v1127
        %v1129 = vrot.slane %v1018, %v1128
        %v1130 = vlaneseq
        %v1131 = vshrl.u32 %v1130, 7
        %v1132 = vsub.s32 2, %v1131
        %v1133 = vrot.slane %v1018, %v1132
        %v1134 = vlaneseq
        %v1135 = vshrl.u32 %v1134, 7
        %v1136 = vsub.s32 3, %v1135
        %v1137 = vrot.slane %v1018, %v1136
        %v1142 = vmul.f32 %v1113, %v1125
        %v1143 = vmul.f32 %v1114, %v1129
        %v1144 = vmul.f32 %v1115, %v1133
        %v1145 = vmul.f32 %v1116, %v1137
        %v1146 = vmul.f32 %v1117, %v1125
        %v1147 = vmul.f32 %v1118, %v1129
        %v1148 = vmul.f32 %v1119, %v1133
        %v1149 = vmul.f32 %v1120, %v1137
        %v1151 = vlaneseq
        %v1152 = vshrl.u32 %v1151, 7
        %v1153 = vsub.s32 0, %v1152
        %v1154 = vrot.slane %v1019, %v1153
        %v1155 = vlaneseq
        %v1156 = vshrl.u32 %v1155, 7
        %v1157 = vsub.s32 1, %v1156
        %v1158 = vrot.slane %v1019, %v1157
        %v1159 = vlaneseq
        %v1160 = vshrl.u32 %v1159, 7
        %v1161 = vsub.s32 2, %v1160
        %v1162 = vrot.slane %v1019, %v1161
        %v1163 = vlaneseq
        %v1164 = vshrl.u32 %v1163, 7
        %v1165 = vsub.s32 3, %v1164
        %v1166 = vrot.slane %v1019, %v1165
        %v1171 = vadd.f32 %v1142, %v1154
        %v1172 = vadd.f32 %v1143, %v1158
        %v1173 = vadd.f32 %v1144, %v1162
        %v1174 = vadd.f32 %v1145, %v1166
        %v1175 = vadd.f32 %v1146, %v1154
        %v1176 = vadd.f32 %v1147, %v1158
        %v1177 = vadd.f32 %v1148, %v1162
        %v1178 = vadd.f32 %v1149, %v1166
        %v1179 = vld [vmem:[%s562] sm:$0xff]
        %v1180 = vld [vmem:[%s562 + $0x8] sm:$0xff]
        %v1181 = vld [vmem:[%s562 + $0x10] sm:$0xff]
        %v1182 = vld [vmem:[%s562 + $0x18] sm:$0xff]
        %v1183 = vld [vmem:[%s562 + $0x20] sm:$0xff]
        %v1184 = vld [vmem:[%s562 + $0x28] sm:$0xff]
        %v1185 = vld [vmem:[%s562 + $0x30] sm:$0xff]
        %v1186 = vld [vmem:[%s562 + $0x38] sm:$0xff]
        %v1187 = vld [vmem:[%s562 + $0x40] sm:$0xff]
        %v1188 = vld [vmem:[%s562 + $0x48] sm:$0xff]
        %v1189 = vld [vmem:[%s562 + $0x50] sm:$0xff]
        %v1190 = vld [vmem:[%s562 + $0x58] sm:$0xff]
        %v1191 = vld [vmem:[%s562 + $0x60] sm:$0xff]
        %v1192 = vld [vmem:[%s562 + $0x68] sm:$0xff]
        %v1193 = vld [vmem:[%s562 + $0x70] sm:$0xff]
        %v1194 = vld [vmem:[%s562 + $0x78] sm:$0xff]
        %v1195 = vld [vmem:[%s562 + $0x80] sm:$0xff]
        %v1196 = vld [vmem:[%s562 + $0x88] sm:$0xff]
        %v1197 = vld [vmem:[%s562 + $0x90] sm:$0xff]
        %v1198 = vld [vmem:[%s562 + $0x98] sm:$0xff]
        %v1199 = vld [vmem:[%s562 + $0xa0] sm:$0xff]
        %v1200 = vld [vmem:[%s562 + $0xa8] sm:$0xff]
        %v1201 = vld [vmem:[%s562 + $0xb0] sm:$0xff]
        %v1202 = vld [vmem:[%s562 + $0xb8] sm:$0xff]
        %v1203 = vld [vmem:[%s562 + $0xc0] sm:$0xff]
        %v1204 = vld [vmem:[%s562 + $0xc8] sm:$0xff]
        %v1205 = vld [vmem:[%s562 + $0xd0] sm:$0xff]
        %v1206 = vld [vmem:[%s562 + $0xd8] sm:$0xff]
        %v1207 = vld [vmem:[%s562 + $0xe0] sm:$0xff]
        %v1208 = vld [vmem:[%s562 + $0xe8] sm:$0xff]
        %v1209 = vld [vmem:[%s562 + $0xf0] sm:$0xff]
        %v1210 = vld [vmem:[%s562 + $0xf8] sm:$0xff]
        %v1211 = vld [vmem:[%s562 + $0x100] sm:$0xff]
        %v1212 = vld [vmem:[%s562 + $0x108] sm:$0xff]
        %v1213 = vld [vmem:[%s562 + $0x110] sm:$0xff]
        %v1214 = vld [vmem:[%s562 + $0x118] sm:$0xff]
        %v1215 = vld [vmem:[%s562 + $0x120] sm:$0xff]
        %v1216 = vld [vmem:[%s562 + $0x128] sm:$0xff]
        %v1217 = vld [vmem:[%s562 + $0x130] sm:$0xff]
        %v1218 = vld [vmem:[%s562 + $0x138] sm:$0xff]
        %v1219 = vld [vmem:[%s562 + $0x140] sm:$0xff]
        %v1220 = vld [vmem:[%s562 + $0x148] sm:$0xff]
        %v1221 = vld [vmem:[%s562 + $0x150] sm:$0xff]
        %v1222 = vld [vmem:[%s562 + $0x158] sm:$0xff]
        %v1223 = vld [vmem:[%s562 + $0x160] sm:$0xff]
        %v1224 = vld [vmem:[%s562 + $0x168] sm:$0xff]
        %v1225 = vld [vmem:[%s562 + $0x170] sm:$0xff]
        %v1226 = vld [vmem:[%s562 + $0x178] sm:$0xff]
        %v1227 = vld [vmem:[%s562 + $0x180] sm:$0xff]
        %v1228 = vld [vmem:[%s562 + $0x188] sm:$0xff]
        %v1229 = vld [vmem:[%s562 + $0x190] sm:$0xff]
        %v1230 = vld [vmem:[%s562 + $0x198] sm:$0xff]
        %v1231 = vld [vmem:[%s562 + $0x1a0] sm:$0xff]
        %v1232 = vld [vmem:[%s562 + $0x1a8] sm:$0xff]
        %v1233 = vld [vmem:[%s562 + $0x1b0] sm:$0xff]
        %v1234 = vld [vmem:[%s562 + $0x1b8] sm:$0xff]
        %v1235 = vld [vmem:[%s562 + $0x1c0] sm:$0xff]
        %v1236 = vld [vmem:[%s562 + $0x1c8] sm:$0xff]
        %v1237 = vld [vmem:[%s562 + $0x1d0] sm:$0xff]
        %v1238 = vld [vmem:[%s562 + $0x1d8] sm:$0xff]
        %v1239 = vld [vmem:[%s562 + $0x1e0] sm:$0xff]
        %v1240 = vld [vmem:[%s562 + $0x1e8] sm:$0xff]
        %v1241 = vld [vmem:[%s562 + $0x1f0] sm:$0xff]
        %v1242 = vld [vmem:[%s562 + $0x1f8] sm:$0xff]
        %v1243 = vld [vmem:[%s562 + $0x200] sm:$0xff]
        %v1244 = vld [vmem:[%s562 + $0x208] sm:$0xff]
        %v1245 = vld [vmem:[%s562 + $0x210] sm:$0xff]
        %v1246 = vld [vmem:[%s562 + $0x218] sm:$0xff]
        %v1247 = vld [vmem:[%s562 + $0x220] sm:$0xff]
        %v1248 = vld [vmem:[%s562 + $0x228] sm:$0xff]
        %v1249 = vld [vmem:[%s562 + $0x230] sm:$0xff]
        %v1250 = vld [vmem:[%s562 + $0x238] sm:$0xff]
        %v1251 = vld [vmem:[%s562 + $0x240] sm:$0xff]
        %v1252 = vld [vmem:[%s562 + $0x248] sm:$0xff]
        %v1253 = vld [vmem:[%s562 + $0x250] sm:$0xff]
        %v1254 = vld [vmem:[%s562 + $0x258] sm:$0xff]
        %v1255 = vld [vmem:[%s562 + $0x260] sm:$0xff]
        %v1256 = vld [vmem:[%s562 + $0x268] sm:$0xff]
        %v1257 = vld [vmem:[%s562 + $0x270] sm:$0xff]
        %v1258 = vld [vmem:[%s562 + $0x278] sm:$0xff]
        %v1259 = vld [vmem:[%s562 + $0x280] sm:$0xff]
        %v1260 = vld [vmem:[%s562 + $0x288] sm:$0xff]
        %v1261 = vld [vmem:[%s562 + $0x290] sm:$0xff]
        %v1262 = vld [vmem:[%s562 + $0x298] sm:$0xff]
        %v1263 = vld [vmem:[%s562 + $0x2a0] sm:$0xff]
        %v1264 = vld [vmem:[%s562 + $0x2a8] sm:$0xff]
        %v1265 = vld [vmem:[%s562 + $0x2b0] sm:$0xff]
        %v1266 = vld [vmem:[%s562 + $0x2b8] sm:$0xff]
        %v1267 = vld [vmem:[%s562 + $0x2c0] sm:$0xff]
        %v1268 = vld [vmem:[%s562 + $0x2c8] sm:$0xff]
        %v1269 = vld [vmem:[%s562 + $0x2d0] sm:$0xff]
        %v1270 = vld [vmem:[%s562 + $0x2d8] sm:$0xff]
        %v1271 = vld [vmem:[%s562 + $0x2e0] sm:$0xff]
        %v1272 = vld [vmem:[%s562 + $0x2e8] sm:$0xff]
        %v1273 = vld [vmem:[%s562 + $0x2f0] sm:$0xff]
        %v1274 = vld [vmem:[%s562 + $0x2f8] sm:$0xff]
        %v1275 = vld [vmem:[%s562 + $0x300] sm:$0xff]
        %v1276 = vld [vmem:[%s562 + $0x308] sm:$0xff]
        %v1277 = vld [vmem:[%s562 + $0x310] sm:$0xff]
        %v1278 = vld [vmem:[%s562 + $0x318] sm:$0xff]
        %v1279 = vld [vmem:[%s562 + $0x320] sm:$0xff]
        %v1280 = vld [vmem:[%s562 + $0x328] sm:$0xff]
        %v1281 = vld [vmem:[%s562 + $0x330] sm:$0xff]
        %v1282 = vld [vmem:[%s562 + $0x338] sm:$0xff]
        %v1283 = vld [vmem:[%s562 + $0x340] sm:$0xff]
        %v1284 = vld [vmem:[%s562 + $0x348] sm:$0xff]
        %v1285 = vld [vmem:[%s562 + $0x350] sm:$0xff]
        %v1286 = vld [vmem:[%s562 + $0x358] sm:$0xff]
        %v1287 = vld [vmem:[%s562 + $0x360] sm:$0xff]
        %v1288 = vld [vmem:[%s562 + $0x368] sm:$0xff]
        %v1289 = vld [vmem:[%s562 + $0x370] sm:$0xff]
        %v1290 = vld [vmem:[%s562 + $0x378] sm:$0xff]
        %v1291 = vld [vmem:[%s562 + $0x380] sm:$0xff]
        %v1292 = vld [vmem:[%s562 + $0x388] sm:$0xff]
        %v1293 = vld [vmem:[%s562 + $0x390] sm:$0xff]
        %v1294 = vld [vmem:[%s562 + $0x398] sm:$0xff]
        %v1295 = vld [vmem:[%s562 + $0x3a0] sm:$0xff]
        %v1296 = vld [vmem:[%s562 + $0x3a8] sm:$0xff]
        %v1297 = vld [vmem:[%s562 + $0x3b0] sm:$0xff]
        %v1298 = vld [vmem:[%s562 + $0x3b8] sm:$0xff]
        %v1299 = vld [vmem:[%s562 + $0x3c0] sm:$0xff]
        %v1300 = vld [vmem:[%s562 + $0x3c8] sm:$0xff]
        %v1301 = vld [vmem:[%s562 + $0x3d0] sm:$0xff]
        %v1302 = vld [vmem:[%s562 + $0x3d8] sm:$0xff]
        %v1303 = vld [vmem:[%s562 + $0x3e0] sm:$0xff]
        %v1304 = vld [vmem:[%s562 + $0x3e8] sm:$0xff]
        %v1305 = vld [vmem:[%s562 + $0x3f0] sm:$0xff]
        %v1306 = vld [vmem:[%s562 + $0x3f8] sm:$0xff]
        %v1307 = vld [vmem:[%s562 + $0x400] sm:$0xff]
        %v1308 = vld [vmem:[%s562 + $0x408] sm:$0xff]
        %v1309 = vld [vmem:[%s562 + $0x410] sm:$0xff]
        %v1310 = vld [vmem:[%s562 + $0x418] sm:$0xff]
        %v1311 = vld [vmem:[%s562 + $0x420] sm:$0xff]
        %v1312 = vld [vmem:[%s562 + $0x428] sm:$0xff]
        %v1313 = vld [vmem:[%s562 + $0x430] sm:$0xff]
        %v1314 = vld [vmem:[%s562 + $0x438] sm:$0xff]
        %v1315 = vld [vmem:[%s562 + $0x440] sm:$0xff]
        %v1316 = vld [vmem:[%s562 + $0x448] sm:$0xff]
        %v1317 = vld [vmem:[%s562 + $0x450] sm:$0xff]
        %v1318 = vld [vmem:[%s562 + $0x458] sm:$0xff]
        %v1319 = vld [vmem:[%s562 + $0x460] sm:$0xff]
        %v1320 = vld [vmem:[%s562 + $0x468] sm:$0xff]
        %v1321 = vld [vmem:[%s562 + $0x470] sm:$0xff]
        %v1322 = vld [vmem:[%s562 + $0x478] sm:$0xff]
        %v1323 = vld [vmem:[%s562 + $0x480] sm:$0xff]
        %v1324 = vld [vmem:[%s562 + $0x488] sm:$0xff]
        %v1325 = vld [vmem:[%s562 + $0x490] sm:$0xff]
        %v1326 = vld [vmem:[%s562 + $0x498] sm:$0xff]
        %v1327 = vld [vmem:[%s562 + $0x4a0] sm:$0xff]
        %v1328 = vld [vmem:[%s562 + $0x4a8] sm:$0xff]
        %v1329 = vld [vmem:[%s562 + $0x4b0] sm:$0xff]
        %v1330 = vld [vmem:[%s562 + $0x4b8] sm:$0xff]
        %v1331 = vld [vmem:[%s562 + $0x4c0] sm:$0xff]
        %v1332 = vld [vmem:[%s562 + $0x4c8] sm:$0xff]
        %v1333 = vld [vmem:[%s562 + $0x4d0] sm:$0xff]
        %v1334 = vld [vmem:[%s562 + $0x4d8] sm:$0xff]
        %v1335 = vld [vmem:[%s562 + $0x4e0] sm:$0xff]
        %v1336 = vld [vmem:[%s562 + $0x4e8] sm:$0xff]
        %v1337 = vld [vmem:[%s562 + $0x4f0] sm:$0xff]
        %v1338 = vld [vmem:[%s562 + $0x4f8] sm:$0xff]
        %v1339 = vld [vmem:[%s562 + $0x500] sm:$0xff]
        %v1340 = vld [vmem:[%s562 + $0x508] sm:$0xff]
        %v1341 = vld [vmem:[%s562 + $0x510] sm:$0xff]
        %v1342 = vld [vmem:[%s562 + $0x518] sm:$0xff]
        %v1343 = vld [vmem:[%s562 + $0x520] sm:$0xff]
        %v1344 = vld [vmem:[%s562 + $0x528] sm:$0xff]
        %v1345 = vld [vmem:[%s562 + $0x530] sm:$0xff]
        %v1346 = vld [vmem:[%s562 + $0x538] sm:$0xff]
        %v1347 = vld [vmem:[%s562 + $0x540] sm:$0xff]
        %v1348 = vld [vmem:[%s562 + $0x548] sm:$0xff]
        %v1349 = vld [vmem:[%s562 + $0x550] sm:$0xff]
        %v1350 = vld [vmem:[%s562 + $0x558] sm:$0xff]
        %v1351 = vld [vmem:[%s562 + $0x560] sm:$0xff]
        %v1352 = vld [vmem:[%s562 + $0x568] sm:$0xff]
        %v1353 = vld [vmem:[%s562 + $0x570] sm:$0xff]
        %v1354 = vld [vmem:[%s562 + $0x578] sm:$0xff]
        %v1355 = vld [vmem:[%s562 + $0x580] sm:$0xff]
        %v1356 = vld [vmem:[%s562 + $0x588] sm:$0xff]
        %v1357 = vld [vmem:[%s562 + $0x590] sm:$0xff]
        %v1358 = vld [vmem:[%s562 + $0x598] sm:$0xff]
        %v1359 = vld [vmem:[%s562 + $0x5a0] sm:$0xff]
        %v1360 = vld [vmem:[%s562 + $0x5a8] sm:$0xff]
        %v1361 = vld [vmem:[%s562 + $0x5b0] sm:$0xff]
        %v1362 = vld [vmem:[%s562 + $0x5b8] sm:$0xff]
        %v1363 = vld [vmem:[%s562 + $0x5c0] sm:$0xff]
        %v1364 = vld [vmem:[%s562 + $0x5c8] sm:$0xff]
        %v1365 = vld [vmem:[%s562 + $0x5d0] sm:$0xff]
        %v1366 = vld [vmem:[%s562 + $0x5d8] sm:$0xff]
        %v1367 = vld [vmem:[%s562 + $0x5e0] sm:$0xff]
        %v1368 = vld [vmem:[%s562 + $0x5e8] sm:$0xff]
        %v1369 = vld [vmem:[%s562 + $0x5f0] sm:$0xff]
        %v1370 = vld [vmem:[%s562 + $0x5f8] sm:$0xff]
        %v1371 = vld [vmem:[%s562 + $0x600] sm:$0xff]
        %v1372 = vld [vmem:[%s562 + $0x608] sm:$0xff]
        %v1373 = vld [vmem:[%s562 + $0x610] sm:$0xff]
        %v1374 = vld [vmem:[%s562 + $0x618] sm:$0xff]
        %v1375 = vld [vmem:[%s562 + $0x620] sm:$0xff]
        %v1376 = vld [vmem:[%s562 + $0x628] sm:$0xff]
        %v1377 = vld [vmem:[%s562 + $0x630] sm:$0xff]
        %v1378 = vld [vmem:[%s562 + $0x638] sm:$0xff]
        %v1379 = vld [vmem:[%s562 + $0x640] sm:$0xff]
        %v1380 = vld [vmem:[%s562 + $0x648] sm:$0xff]
        %v1381 = vld [vmem:[%s562 + $0x650] sm:$0xff]
        %v1382 = vld [vmem:[%s562 + $0x658] sm:$0xff]
        %v1383 = vld [vmem:[%s562 + $0x660] sm:$0xff]
        %v1384 = vld [vmem:[%s562 + $0x668] sm:$0xff]
        %v1385 = vld [vmem:[%s562 + $0x670] sm:$0xff]
        %v1386 = vld [vmem:[%s562 + $0x678] sm:$0xff]
        %v1387 = vld [vmem:[%s562 + $0x680] sm:$0xff]
        %v1388 = vld [vmem:[%s562 + $0x688] sm:$0xff]
        %v1389 = vld [vmem:[%s562 + $0x690] sm:$0xff]
        %v1390 = vld [vmem:[%s562 + $0x698] sm:$0xff]
        %v1391 = vld [vmem:[%s562 + $0x6a0] sm:$0xff]
        %v1392 = vld [vmem:[%s562 + $0x6a8] sm:$0xff]
        %v1393 = vld [vmem:[%s562 + $0x6b0] sm:$0xff]
        %v1394 = vld [vmem:[%s562 + $0x6b8] sm:$0xff]
        %v1395 = vld [vmem:[%s562 + $0x6c0] sm:$0xff]
        %v1396 = vld [vmem:[%s562 + $0x6c8] sm:$0xff]
        %v1397 = vld [vmem:[%s562 + $0x6d0] sm:$0xff]
        %v1398 = vld [vmem:[%s562 + $0x6d8] sm:$0xff]
        %v1399 = vld [vmem:[%s562 + $0x6e0] sm:$0xff]
        %v1400 = vld [vmem:[%s562 + $0x6e8] sm:$0xff]
        %v1401 = vld [vmem:[%s562 + $0x6f0] sm:$0xff]
        %v1402 = vld [vmem:[%s562 + $0x6f8] sm:$0xff]
        %v1403 = vld [vmem:[%s562 + $0x700] sm:$0xff]
        %v1404 = vld [vmem:[%s562 + $0x708] sm:$0xff]
        %v1405 = vld [vmem:[%s562 + $0x710] sm:$0xff]
        %v1406 = vld [vmem:[%s562 + $0x718] sm:$0xff]
        %v1407 = vld [vmem:[%s562 + $0x720] sm:$0xff]
        %v1408 = vld [vmem:[%s562 + $0x728] sm:$0xff]
        %v1409 = vld [vmem:[%s562 + $0x730] sm:$0xff]
        %v1410 = vld [vmem:[%s562 + $0x738] sm:$0xff]
        %v1411 = vld [vmem:[%s562 + $0x740] sm:$0xff]
        %v1412 = vld [vmem:[%s562 + $0x748] sm:$0xff]
        %v1413 = vld [vmem:[%s562 + $0x750] sm:$0xff]
        %v1414 = vld [vmem:[%s562 + $0x758] sm:$0xff]
        %v1415 = vld [vmem:[%s562 + $0x760] sm:$0xff]
        %v1416 = vld [vmem:[%s562 + $0x768] sm:$0xff]
        %v1417 = vld [vmem:[%s562 + $0x770] sm:$0xff]
        %v1418 = vld [vmem:[%s562 + $0x778] sm:$0xff]
        %v1419 = vld [vmem:[%s562 + $0x780] sm:$0xff]
        %v1420 = vld [vmem:[%s562 + $0x788] sm:$0xff]
        %v1421 = vld [vmem:[%s562 + $0x790] sm:$0xff]
        %v1422 = vld [vmem:[%s562 + $0x798] sm:$0xff]
        %v1423 = vld [vmem:[%s562 + $0x7a0] sm:$0xff]
        %v1424 = vld [vmem:[%s562 + $0x7a8] sm:$0xff]
        %v1425 = vld [vmem:[%s562 + $0x7b0] sm:$0xff]
        %v1426 = vld [vmem:[%s562 + $0x7b8] sm:$0xff]
        %v1427 = vld [vmem:[%s562 + $0x7c0] sm:$0xff]
        %v1428 = vld [vmem:[%s562 + $0x7c8] sm:$0xff]
        %v1429 = vld [vmem:[%s562 + $0x7d0] sm:$0xff]
        %v1430 = vld [vmem:[%s562 + $0x7d8] sm:$0xff]
        %v1431 = vld [vmem:[%s562 + $0x7e0] sm:$0xff]
        %v1432 = vld [vmem:[%s562 + $0x7e8] sm:$0xff]
        %v1433 = vld [vmem:[%s562 + $0x7f0] sm:$0xff]
        %v1434 = vld [vmem:[%s562 + $0x7f8] sm:$0xff]
        %v1435 = vld [vmem:[%s562 + $0x800] sm:$0xff]
        %v1436 = vld [vmem:[%s562 + $0x808] sm:$0xff]
        %v1437 = vld [vmem:[%s562 + $0x810] sm:$0xff]
        %v1438 = vld [vmem:[%s562 + $0x818] sm:$0xff]
        %v1439 = vld [vmem:[%s562 + $0x820] sm:$0xff]
        %v1440 = vld [vmem:[%s562 + $0x828] sm:$0xff]
        %v1441 = vld [vmem:[%s562 + $0x830] sm:$0xff]
        %v1442 = vld [vmem:[%s562 + $0x838] sm:$0xff]
        %v1443 = vld [vmem:[%s562 + $0x840] sm:$0xff]
        %v1444 = vld [vmem:[%s562 + $0x848] sm:$0xff]
        %v1445 = vld [vmem:[%s562 + $0x850] sm:$0xff]
        %v1446 = vld [vmem:[%s562 + $0x858] sm:$0xff]
        %v1447 = vld [vmem:[%s562 + $0x860] sm:$0xff]
        %v1448 = vld [vmem:[%s562 + $0x868] sm:$0xff]
        %v1449 = vld [vmem:[%s562 + $0x870] sm:$0xff]
        %v1450 = vld [vmem:[%s562 + $0x878] sm:$0xff]
        %v1451 = vld [vmem:[%s562 + $0x880] sm:$0xff]
        %v1452 = vld [vmem:[%s562 + $0x888] sm:$0xff]
        %v1453 = vld [vmem:[%s562 + $0x890] sm:$0xff]
        %v1454 = vld [vmem:[%s562 + $0x898] sm:$0xff]
        %v1455 = vld [vmem:[%s562 + $0x8a0] sm:$0xff]
        %v1456 = vld [vmem:[%s562 + $0x8a8] sm:$0xff]
        %v1457 = vld [vmem:[%s562 + $0x8b0] sm:$0xff]
        %v1458 = vld [vmem:[%s562 + $0x8b8] sm:$0xff]
        %v1459 = vld [vmem:[%s562 + $0x8c0] sm:$0xff]
        %v1460 = vld [vmem:[%s562 + $0x8c8] sm:$0xff]
        %v1461 = vld [vmem:[%s562 + $0x8d0] sm:$0xff]
        %v1462 = vld [vmem:[%s562 + $0x8d8] sm:$0xff]
        %v1463 = vld [vmem:[%s562 + $0x8e0] sm:$0xff]
        %v1464 = vld [vmem:[%s562 + $0x8e8] sm:$0xff]
        %v1465 = vld [vmem:[%s562 + $0x8f0] sm:$0xff]
        %v1466 = vld [vmem:[%s562 + $0x8f8] sm:$0xff]
        %v1467 = vld [vmem:[%s562 + $0x900] sm:$0xff]
        %v1468 = vld [vmem:[%s562 + $0x908] sm:$0xff]
        %v1469 = vld [vmem:[%s562 + $0x910] sm:$0xff]
        %v1470 = vld [vmem:[%s562 + $0x918] sm:$0xff]
        %v1471 = vld [vmem:[%s562 + $0x920] sm:$0xff]
        %v1472 = vld [vmem:[%s562 + $0x928] sm:$0xff]
        %v1473 = vld [vmem:[%s562 + $0x930] sm:$0xff]
        %v1474 = vld [vmem:[%s562 + $0x938] sm:$0xff]
        %v1475 = vld [vmem:[%s562 + $0x940] sm:$0xff]
        %v1476 = vld [vmem:[%s562 + $0x948] sm:$0xff]
        %v1477 = vld [vmem:[%s562 + $0x950] sm:$0xff]
        %v1478 = vld [vmem:[%s562 + $0x958] sm:$0xff]
        %v1479 = vld [vmem:[%s562 + $0x960] sm:$0xff]
        %v1480 = vld [vmem:[%s562 + $0x968] sm:$0xff]
        %v1481 = vld [vmem:[%s562 + $0x970] sm:$0xff]
        %v1482 = vld [vmem:[%s562 + $0x978] sm:$0xff]
        %v1483 = vld [vmem:[%s562 + $0x980] sm:$0xff]
        %v1484 = vld [vmem:[%s562 + $0x988] sm:$0xff]
        %v1485 = vld [vmem:[%s562 + $0x990] sm:$0xff]
        %v1486 = vld [vmem:[%s562 + $0x998] sm:$0xff]
        %v1487 = vld [vmem:[%s562 + $0x9a0] sm:$0xff]
        %v1488 = vld [vmem:[%s562 + $0x9a8] sm:$0xff]
        %v1489 = vld [vmem:[%s562 + $0x9b0] sm:$0xff]
        %v1490 = vld [vmem:[%s562 + $0x9b8] sm:$0xff]
        %v1491 = vld [vmem:[%s562 + $0x9c0] sm:$0xff]
        %v1492 = vld [vmem:[%s562 + $0x9c8] sm:$0xff]
        %v1493 = vld [vmem:[%s562 + $0x9d0] sm:$0xff]
        %v1494 = vld [vmem:[%s562 + $0x9d8] sm:$0xff]
        %v1495 = vld [vmem:[%s562 + $0x9e0] sm:$0xff]
        %v1496 = vld [vmem:[%s562 + $0x9e8] sm:$0xff]
        %v1497 = vld [vmem:[%s562 + $0x9f0] sm:$0xff]
        %v1498 = vld [vmem:[%s562 + $0x9f8] sm:$0xff]
        %v1499 = vld [vmem:[%s562 + $0xa00] sm:$0xff]
        %v1500 = vld [vmem:[%s562 + $0xa08] sm:$0xff]
        %v1501 = vld [vmem:[%s562 + $0xa10] sm:$0xff]
        %v1502 = vld [vmem:[%s562 + $0xa18] sm:$0xff]
        %v1503 = vld [vmem:[%s562 + $0xa20] sm:$0xff]
        %v1504 = vld [vmem:[%s562 + $0xa28] sm:$0xff]
        %v1505 = vld [vmem:[%s562 + $0xa30] sm:$0xff]
        %v1506 = vld [vmem:[%s562 + $0xa38] sm:$0xff]
        %v1507 = vld [vmem:[%s562 + $0xa40] sm:$0xff]
        %v1508 = vld [vmem:[%s562 + $0xa48] sm:$0xff]
        %v1509 = vld [vmem:[%s562 + $0xa50] sm:$0xff]
        %v1510 = vld [vmem:[%s562 + $0xa58] sm:$0xff]
        %v1511 = vld [vmem:[%s562 + $0xa60] sm:$0xff]
        %v1512 = vld [vmem:[%s562 + $0xa68] sm:$0xff]
        %v1513 = vld [vmem:[%s562 + $0xa70] sm:$0xff]
        %v1514 = vld [vmem:[%s562 + $0xa78] sm:$0xff]
        %v1515 = vld [vmem:[%s562 + $0xa80] sm:$0xff]
        %v1516 = vld [vmem:[%s562 + $0xa88] sm:$0xff]
        %v1517 = vld [vmem:[%s562 + $0xa90] sm:$0xff]
        %v1518 = vld [vmem:[%s562 + $0xa98] sm:$0xff]
        %v1519 = vld [vmem:[%s562 + $0xaa0] sm:$0xff]
        %v1520 = vld [vmem:[%s562 + $0xaa8] sm:$0xff]
        %v1521 = vld [vmem:[%s562 + $0xab0] sm:$0xff]
        %v1522 = vld [vmem:[%s562 + $0xab8] sm:$0xff]
        %v1523 = vld [vmem:[%s562 + $0xac0] sm:$0xff]
        %v1524 = vld [vmem:[%s562 + $0xac8] sm:$0xff]
        %v1525 = vld [vmem:[%s562 + $0xad0] sm:$0xff]
        %v1526 = vld [vmem:[%s562 + $0xad8] sm:$0xff]
        %v1527 = vld [vmem:[%s562 + $0xae0] sm:$0xff]
        %v1528 = vld [vmem:[%s562 + $0xae8] sm:$0xff]
        %v1529 = vld [vmem:[%s562 + $0xaf0] sm:$0xff]
        %v1530 = vld [vmem:[%s562 + $0xaf8] sm:$0xff]
        %v1531 = vld [vmem:[%s562 + $0xb00] sm:$0xff]
        %v1532 = vld [vmem:[%s562 + $0xb08] sm:$0xff]
        %v1533 = vld [vmem:[%s562 + $0xb10] sm:$0xff]
        %v1534 = vld [vmem:[%s562 + $0xb18] sm:$0xff]
        %v1535 = vld [vmem:[%s562 + $0xb20] sm:$0xff]
        %v1536 = vld [vmem:[%s562 + $0xb28] sm:$0xff]
        %v1537 = vld [vmem:[%s562 + $0xb30] sm:$0xff]
        %v1538 = vld [vmem:[%s562 + $0xb38] sm:$0xff]
        %v1539 = vld [vmem:[%s562 + $0xb40] sm:$0xff]
        %v1540 = vld [vmem:[%s562 + $0xb48] sm:$0xff]
        %v1541 = vld [vmem:[%s562 + $0xb50] sm:$0xff]
        %v1542 = vld [vmem:[%s562 + $0xb58] sm:$0xff]
        %v1543 = vld [vmem:[%s562 + $0xb60] sm:$0xff]
        %v1544 = vld [vmem:[%s562 + $0xb68] sm:$0xff]
        %v1545 = vld [vmem:[%s562 + $0xb70] sm:$0xff]
        %v1546 = vld [vmem:[%s562 + $0xb78] sm:$0xff]
        %v1547 = vld [vmem:[%s562 + $0xb80] sm:$0xff]
        %v1548 = vld [vmem:[%s562 + $0xb88] sm:$0xff]
        %v1549 = vld [vmem:[%s562 + $0xb90] sm:$0xff]
        %v1550 = vld [vmem:[%s562 + $0xb98] sm:$0xff]
        %v1551 = vld [vmem:[%s562 + $0xba0] sm:$0xff]
        %v1552 = vld [vmem:[%s562 + $0xba8] sm:$0xff]
        %v1553 = vld [vmem:[%s562 + $0xbb0] sm:$0xff]
        %v1554 = vld [vmem:[%s562 + $0xbb8] sm:$0xff]
        %v1555 = vld [vmem:[%s562 + $0xbc0] sm:$0xff]
        %v1556 = vld [vmem:[%s562 + $0xbc8] sm:$0xff]
        %v1557 = vld [vmem:[%s562 + $0xbd0] sm:$0xff]
        %v1558 = vld [vmem:[%s562 + $0xbd8] sm:$0xff]
        %v1559 = vld [vmem:[%s562 + $0xbe0] sm:$0xff]
        %v1560 = vld [vmem:[%s562 + $0xbe8] sm:$0xff]
        %v1561 = vld [vmem:[%s562 + $0xbf0] sm:$0xff]
        %v1562 = vld [vmem:[%s562 + $0xbf8] sm:$0xff]
        %v1563 = vld [vmem:[%s562 + $0xc00] sm:$0xff]
        %v1564 = vld [vmem:[%s562 + $0xc08] sm:$0xff]
        %v1565 = vld [vmem:[%s562 + $0xc10] sm:$0xff]
        %v1566 = vld [vmem:[%s562 + $0xc18] sm:$0xff]
        %v1567 = vld [vmem:[%s562 + $0xc20] sm:$0xff]
        %v1568 = vld [vmem:[%s562 + $0xc28] sm:$0xff]
        %v1569 = vld [vmem:[%s562 + $0xc30] sm:$0xff]
        %v1570 = vld [vmem:[%s562 + $0xc38] sm:$0xff]
        %v1571 = vld [vmem:[%s562 + $0xc40] sm:$0xff]
        %v1572 = vld [vmem:[%s562 + $0xc48] sm:$0xff]
        %v1573 = vld [vmem:[%s562 + $0xc50] sm:$0xff]
        %v1574 = vld [vmem:[%s562 + $0xc58] sm:$0xff]
        %v1575 = vld [vmem:[%s562 + $0xc60] sm:$0xff]
        %v1576 = vld [vmem:[%s562 + $0xc68] sm:$0xff]
        %v1577 = vld [vmem:[%s562 + $0xc70] sm:$0xff]
        %v1578 = vld [vmem:[%s562 + $0xc78] sm:$0xff]
        %v1579 = vld [vmem:[%s562 + $0xc80] sm:$0xff]
        %v1580 = vld [vmem:[%s562 + $0xc88] sm:$0xff]
        %v1581 = vld [vmem:[%s562 + $0xc90] sm:$0xff]
        %v1582 = vld [vmem:[%s562 + $0xc98] sm:$0xff]
        %v1583 = vld [vmem:[%s562 + $0xca0] sm:$0xff]
        %v1584 = vld [vmem:[%s562 + $0xca8] sm:$0xff]
        %v1585 = vld [vmem:[%s562 + $0xcb0] sm:$0xff]
        %v1586 = vld [vmem:[%s562 + $0xcb8] sm:$0xff]
        %v1587 = vld [vmem:[%s562 + $0xcc0] sm:$0xff]
        %v1588 = vld [vmem:[%s562 + $0xcc8] sm:$0xff]
        %v1589 = vld [vmem:[%s562 + $0xcd0] sm:$0xff]
        %v1590 = vld [vmem:[%s562 + $0xcd8] sm:$0xff]
        %v1591 = vld [vmem:[%s562 + $0xce0] sm:$0xff]
        %v1592 = vld [vmem:[%s562 + $0xce8] sm:$0xff]
        %v1593 = vld [vmem:[%s562 + $0xcf0] sm:$0xff]
        %v1594 = vld [vmem:[%s562 + $0xcf8] sm:$0xff]
        %v1595 = vld [vmem:[%s562 + $0xd00] sm:$0xff]
        %v1596 = vld [vmem:[%s562 + $0xd08] sm:$0xff]
        %v1597 = vld [vmem:[%s562 + $0xd10] sm:$0xff]
        %v1598 = vld [vmem:[%s562 + $0xd18] sm:$0xff]
        %v1599 = vld [vmem:[%s562 + $0xd20] sm:$0xff]
        %v1600 = vld [vmem:[%s562 + $0xd28] sm:$0xff]
        %v1601 = vld [vmem:[%s562 + $0xd30] sm:$0xff]
        %v1602 = vld [vmem:[%s562 + $0xd38] sm:$0xff]
        %v1603 = vld [vmem:[%s562 + $0xd40] sm:$0xff]
        %v1604 = vld [vmem:[%s562 + $0xd48] sm:$0xff]
        %v1605 = vld [vmem:[%s562 + $0xd50] sm:$0xff]
        %v1606 = vld [vmem:[%s562 + $0xd58] sm:$0xff]
        %v1607 = vld [vmem:[%s562 + $0xd60] sm:$0xff]
        %v1608 = vld [vmem:[%s562 + $0xd68] sm:$0xff]
        %v1609 = vld [vmem:[%s562 + $0xd70] sm:$0xff]
        %v1610 = vld [vmem:[%s562 + $0xd78] sm:$0xff]
        %v1611 = vld [vmem:[%s562 + $0xd80] sm:$0xff]
        %v1612 = vld [vmem:[%s562 + $0xd88] sm:$0xff]
        %v1613 = vld [vmem:[%s562 + $0xd90] sm:$0xff]
        %v1614 = vld [vmem:[%s562 + $0xd98] sm:$0xff]
        %v1615 = vld [vmem:[%s562 + $0xda0] sm:$0xff]
        %v1616 = vld [vmem:[%s562 + $0xda8] sm:$0xff]
        %v1617 = vld [vmem:[%s562 + $0xdb0] sm:$0xff]
        %v1618 = vld [vmem:[%s562 + $0xdb8] sm:$0xff]
        %v1619 = vld [vmem:[%s562 + $0xdc0] sm:$0xff]
        %v1620 = vld [vmem:[%s562 + $0xdc8] sm:$0xff]
        %v1621 = vld [vmem:[%s562 + $0xdd0] sm:$0xff]
        %v1622 = vld [vmem:[%s562 + $0xdd8] sm:$0xff]
        %v1623 = vld [vmem:[%s562 + $0xde0] sm:$0xff]
        %v1624 = vld [vmem:[%s562 + $0xde8] sm:$0xff]
        %v1625 = vld [vmem:[%s562 + $0xdf0] sm:$0xff]
        %v1626 = vld [vmem:[%s562 + $0xdf8] sm:$0xff]
        %v1627 = vld [vmem:[%s562 + $0xe00] sm:$0xff]
        %v1628 = vld [vmem:[%s562 + $0xe08] sm:$0xff]
        %v1629 = vld [vmem:[%s562 + $0xe10] sm:$0xff]
        %v1630 = vld [vmem:[%s562 + $0xe18] sm:$0xff]
        %v1631 = vld [vmem:[%s562 + $0xe20] sm:$0xff]
        %v1632 = vld [vmem:[%s562 + $0xe28] sm:$0xff]
        %v1633 = vld [vmem:[%s562 + $0xe30] sm:$0xff]
        %v1634 = vld [vmem:[%s562 + $0xe38] sm:$0xff]
        %v1635 = vld [vmem:[%s562 + $0xe40] sm:$0xff]
        %v1636 = vld [vmem:[%s562 + $0xe48] sm:$0xff]
        %v1637 = vld [vmem:[%s562 + $0xe50] sm:$0xff]
        %v1638 = vld [vmem:[%s562 + $0xe58] sm:$0xff]
        %v1639 = vld [vmem:[%s562 + $0xe60] sm:$0xff]
        %v1640 = vld [vmem:[%s562 + $0xe68] sm:$0xff]
        %v1641 = vld [vmem:[%s562 + $0xe70] sm:$0xff]
        %v1642 = vld [vmem:[%s562 + $0xe78] sm:$0xff]
        %v1643 = vld [vmem:[%s562 + $0xe80] sm:$0xff]
        %v1644 = vld [vmem:[%s562 + $0xe88] sm:$0xff]
        %v1645 = vld [vmem:[%s562 + $0xe90] sm:$0xff]
        %v1646 = vld [vmem:[%s562 + $0xe98] sm:$0xff]
        %v1647 = vld [vmem:[%s562 + $0xea0] sm:$0xff]
        %v1648 = vld [vmem:[%s562 + $0xea8] sm:$0xff]
        %v1649 = vld [vmem:[%s562 + $0xeb0] sm:$0xff]
        %v1650 = vld [vmem:[%s562 + $0xeb8] sm:$0xff]
        %v1651 = vld [vmem:[%s562 + $0xec0] sm:$0xff]
        %v1652 = vld [vmem:[%s562 + $0xec8] sm:$0xff]
        %v1653 = vld [vmem:[%s562 + $0xed0] sm:$0xff]
        %v1654 = vld [vmem:[%s562 + $0xed8] sm:$0xff]
        %v1655 = vld [vmem:[%s562 + $0xee0] sm:$0xff]
        %v1656 = vld [vmem:[%s562 + $0xee8] sm:$0xff]
        %v1657 = vld [vmem:[%s562 + $0xef0] sm:$0xff]
        %v1658 = vld [vmem:[%s562 + $0xef8] sm:$0xff]
        %v1659 = vld [vmem:[%s562 + $0xf00] sm:$0xff]
        %v1660 = vld [vmem:[%s562 + $0xf08] sm:$0xff]
        %v1661 = vld [vmem:[%s562 + $0xf10] sm:$0xff]
        %v1662 = vld [vmem:[%s562 + $0xf18] sm:$0xff]
        %v1663 = vld [vmem:[%s562 + $0xf20] sm:$0xff]
        %v1664 = vld [vmem:[%s562 + $0xf28] sm:$0xff]
        %v1665 = vld [vmem:[%s562 + $0xf30] sm:$0xff]
        %v1666 = vld [vmem:[%s562 + $0xf38] sm:$0xff]
        %v1667 = vld [vmem:[%s562 + $0xf40] sm:$0xff]
        %v1668 = vld [vmem:[%s562 + $0xf48] sm:$0xff]
        %v1669 = vld [vmem:[%s562 + $0xf50] sm:$0xff]
        %v1670 = vld [vmem:[%s562 + $0xf58] sm:$0xff]
        %v1671 = vld [vmem:[%s562 + $0xf60] sm:$0xff]
        %v1672 = vld [vmem:[%s562 + $0xf68] sm:$0xff]
        %v1673 = vld [vmem:[%s562 + $0xf70] sm:$0xff]
        %v1674 = vld [vmem:[%s562 + $0xf78] sm:$0xff]
        %v1675 = vld [vmem:[%s562 + $0xf80] sm:$0xf]
        %v1676 = vld [vmem:[%s562 + $0xf88] sm:$0xf]
        %v1677 = vld [vmem:[%s562 + $0xf90] sm:$0xf]
        %v1678 = vld [vmem:[%s562 + $0xf98] sm:$0xf]
        %v1679 = vld [vmem:[%s562 + $0xfa0] sm:$0xf]
        %v1680 = vld [vmem:[%s562 + $0xfa8] sm:$0xf]
        %v1681 = vld [vmem:[%s562 + $0xfb0] sm:$0xf]
        %v1682 = vld [vmem:[%s562 + $0xfb8] sm:$0xf]
        %v1683 = vld [vmem:[%s571] sm:$0xff]
        %v1685 = vlaneseq
        %v1686 = vshrl.u32 %v1685, 7
        %v1687 = vsub.s32 0, %v1686
        %v1688 = vrot.slane %v1683, %v1687
        %v1689 = vlaneseq
        %v1690 = vshrl.u32 %v1689, 7
        %v1691 = vsub.s32 1, %v1690
        %v1692 = vrot.slane %v1683, %v1691
        %v1693 = vlaneseq
        %v1694 = vshrl.u32 %v1693, 7
        %v1695 = vsub.s32 2, %v1694
        %v1696 = vrot.slane %v1683, %v1695
        %v1697 = vlaneseq
        %v1698 = vshrl.u32 %v1697, 7
        %v1699 = vsub.s32 3, %v1698
        %v1700 = vrot.slane %v1683, %v1699
        %v1701 = vlaneseq
        %v1702 = vshrl.u32 %v1701, 7
        %v1703 = vsub.s32 4, %v1702
        %v1704 = vrot.slane %v1683, %v1703
        %v1705 = vlaneseq
        %v1706 = vshrl.u32 %v1705, 7
        %v1707 = vsub.s32 5, %v1706
        %v1708 = vrot.slane %v1683, %v1707
        %v1709 = vlaneseq
        %v1710 = vshrl.u32 %v1709, 7
        %v1711 = vsub.s32 6, %v1710
        %v1712 = vrot.slane %v1683, %v1711
        %v1713 = vlaneseq
        %v1714 = vshrl.u32 %v1713, 7
        %v1715 = vsub.s32 7, %v1714
        %v1716 = vrot.slane %v1683, %v1715
        %v1726 = vsel %vm1041, %v1174, 0
        %v1729 = vsel %vm1041, %v1178, 0
        %v1732 = vsel %vm843, %v1675, 0
        %v1735 = vsel %vm843, %v1676, 0
        %v1738 = vsel %vm843, %v1677, 0
        %v1741 = vsel %vm843, %v1678, 0
        %v1744 = vsel %vm843, %v1679, 0
        %v1747 = vsel %vm843, %v1680, 0
        %v1750 = vsel %vm843, %v1681, 0
        %v1753 = vsel %vm843, %v1682, 0
        %1755 = vmatprep.subr.mxu0 %v1180
        %1756 = vmatpush1.msra.mxu0 %v1179
        %1757 = vmatprep.subr.mxu0 %v1188
        %1758 = vmatpush1.msra.mxu0 %v1187
        %1759 = vmatprep.subr.mxu0 %v1196
        %1760 = vmatpush1.msra.mxu0 %v1195
        %1761 = vmatprep.subr.mxu0 %v1204
        %1762 = vmatpush1.msra.mxu0 %v1203
        %1763 = vmatprep.subr.mxu0 %v1212
        %1764 = vmatpush1.msra.mxu0 %v1211
        %1765 = vmatprep.subr.mxu0 %v1220
        %1766 = vmatpush1.msra.mxu0 %v1219
        %1767 = vmatprep.subr.mxu0 %v1228
        %1768 = vmatpush1.msra.mxu0 %v1227
        %1769 = vmatprep.subr.mxu0 %v1236
        %1770 = vmatpush1.msra.mxu0 %v1235
        %1771 = vmatprep.subr.mxu0 %v1244
        %1772 = vmatpush1.msra.mxu0 %v1243
        %1773 = vmatprep.subr.mxu0 %v1252
        %1774 = vmatpush1.msra.mxu0 %v1251
        %1775 = vmatprep.subr.mxu0 %v1260
        %1776 = vmatpush1.msra.mxu0 %v1259
        %1777 = vmatprep.subr.mxu0 %v1268
        %1778 = vmatpush1.msra.mxu0 %v1267
        %1779 = vmatprep.subr.mxu0 %v1276
        %1780 = vmatpush1.msra.mxu0 %v1275
        %1781 = vmatprep.subr.mxu0 %v1284
        %1782 = vmatpush1.msra.mxu0 %v1283
        %1783 = vmatprep.subr.mxu0 %v1292
        %1784 = vmatpush1.msra.mxu0 %v1291
        %1785 = vmatprep.subr.mxu0 %v1300
        %1786 = vmatpush1.msra.mxu0 %v1299
        %1787 = vmatprep.subr.mxu0 %v1308
        %1788 = vmatpush1.msra.mxu0 %v1307
        %1789 = vmatprep.subr.mxu0 %v1316
        %1790 = vmatpush1.msra.mxu0 %v1315
        %1791 = vmatprep.subr.mxu0 %v1324
        %1792 = vmatpush1.msra.mxu0 %v1323
        %1793 = vmatprep.subr.mxu0 %v1332
        %1794 = vmatpush1.msra.mxu0 %v1331
        %1795 = vmatprep.subr.mxu0 %v1340
        %1796 = vmatpush1.msra.mxu0 %v1339
        %1797 = vmatprep.subr.mxu0 %v1348
        %1798 = vmatpush1.msra.mxu0 %v1347
        %1799 = vmatprep.subr.mxu0 %v1356
        %1800 = vmatpush1.msra.mxu0 %v1355
        %1801 = vmatprep.subr.mxu0 %v1364
        %1802 = vmatpush1.msra.mxu0 %v1363
        %1803 = vmatprep.subr.mxu0 %v1372
        %1804 = vmatpush1.msra.mxu0 %v1371
        %1805 = vmatprep.subr.mxu0 %v1380
        %1806 = vmatpush1.msra.mxu0 %v1379
        %1807 = vmatprep.subr.mxu0 %v1388
        %1808 = vmatpush1.msra.mxu0 %v1387
        %1809 = vmatprep.subr.mxu0 %v1396
        %1810 = vmatpush1.msra.mxu0 %v1395
        %1811 = vmatprep.subr.mxu0 %v1404
        %1812 = vmatpush1.msra.mxu0 %v1403
        %1813 = vmatprep.subr.mxu0 %v1412
        %1814 = vmatpush1.msra.mxu0 %v1411
        %1815 = vmatprep.subr.mxu0 %v1420
        %1816 = vmatpush1.msra.mxu0 %v1419
        %1817 = vmatprep.subr.mxu0 %v1428
        %1818 = vmatpush1.msra.mxu0 %v1427
        %1819 = vmatprep.mubr.f32.mxu0 %v1172
        %1820 = vmatmul.mubr.f32.gmra.mrb[0].mxu0 %v1171
        %v1821 = vpop.f32.mrb[0].mxu0
        %v1822 = vadd.f32 %v1688, %v1821
        %v1823 = vpop.f32.mrb[0].mxu0
        %v1824 = vadd.f32 %v1692, %v1823
        %1825 = vmatprep.mubr.f32.mxu0 %v1176
        %1826 = vmatmul.mubr.f32.gmra.mrb[0].mxu0 %v1175
        %v1827 = vpop.f32.mrb[0].mxu0
        %v1828 = vadd.f32 %v1688, %v1827
        %v1829 = vpop.f32.mrb[0].mxu0
        %v1830 = vadd.f32 %v1692, %v1829
        %1831 = vdwg.mxu0
        %1832 = vmatprep.subr.mxu0 %v1436
        %1833 = vmatpush1.msra.mxu0 %v1435
        %1834 = vmatprep.subr.mxu0 %v1444
        %1835 = vmatpush1.msra.mxu0 %v1443
        %1836 = vmatprep.subr.mxu0 %v1452
        %1837 = vmatpush1.msra.mxu0 %v1451
        %1838 = vmatprep.subr.mxu0 %v1460
        %1839 = vmatpush1.msra.mxu0 %v1459
        %1840 = vmatprep.subr.mxu0 %v1468
        %1841 = vmatpush1.msra.mxu0 %v1467
        %1842 = vmatprep.subr.mxu0 %v1476
        %1843 = vmatpush1.msra.mxu0 %v1475
        %1844 = vmatprep.subr.mxu0 %v1484
        %1845 = vmatpush1.msra.mxu0 %v1483
        %1846 = vmatprep.subr.mxu0 %v1492
        %1847 = vmatpush1.msra.mxu0 %v1491
        %1848 = vmatprep.subr.mxu0 %v1500
        %1849 = vmatpush1.msra.mxu0 %v1499
        %1850 = vmatprep.subr.mxu0 %v1508
        %1851 = vmatpush1.msra.mxu0 %v1507
        %1852 = vmatprep.subr.mxu0 %v1516
        %1853 = vmatpush1.msra.mxu0 %v1515
        %1854 = vmatprep.subr.mxu0 %v1524
        %1855 = vmatpush1.msra.mxu0 %v1523
        %1856 = vmatprep.subr.mxu0 %v1532
        %1857 = vmatpush1.msra.mxu0 %v1531
        %1858 = vmatprep.subr.mxu0 %v1540
        %1859 = vmatpush1.msra.mxu0 %v1539
        %1860 = vmatprep.subr.mxu0 %v1548
        %1861 = vmatpush1.msra.mxu0 %v1547
        %1862 = vmatprep.subr.mxu0 %v1556
        %1863 = vmatpush1.msra.mxu0 %v1555
        %1864 = vmatprep.subr.mxu0 %v1564
        %1865 = vmatpush1.msra.mxu0 %v1563
        %1866 = vmatprep.subr.mxu0 %v1572
        %1867 = vmatpush1.msra.mxu0 %v1571
        %1868 = vmatprep.subr.mxu0 %v1580
        %1869 = vmatpush1.msra.mxu0 %v1579
        %1870 = vmatprep.subr.mxu0 %v1588
        %1871 = vmatpush1.msra.mxu0 %v1587
        %1872 = vmatprep.subr.mxu0 %v1596
        %1873 = vmatpush1.msra.mxu0 %v1595
        %1874 = vmatprep.subr.mxu0 %v1604
        %1875 = vmatpush1.msra.mxu0 %v1603
        %1876 = vmatprep.subr.mxu0 %v1612
        %1877 = vmatpush1.msra.mxu0 %v1611
        %1878 = vmatprep.subr.mxu0 %v1620
        %1879 = vmatpush1.msra.mxu0 %v1619
        %1880 = vmatprep.subr.mxu0 %v1628
        %1881 = vmatpush1.msra.mxu0 %v1627
        %1882 = vmatprep.subr.mxu0 %v1636
        %1883 = vmatpush1.msra.mxu0 %v1635
        %1884 = vmatprep.subr.mxu0 %v1644
        %1885 = vmatpush1.msra.mxu0 %v1643
        %1886 = vmatprep.subr.mxu0 %v1652
        %1887 = vmatpush1.msra.mxu0 %v1651
        %1888 = vmatprep.subr.mxu0 %v1660
        %1889 = vmatpush1.msra.mxu0 %v1659
        %1890 = vmatprep.subr.mxu0 %v1668
        %1891 = vmatpush1.msra.mxu0 %v1667
        %1892 = vmatprep.subr.mxu0 %v1735
        %1893 = vmatpush1.msra.mxu0 %v1732
        %1894 = vmatprep.subr.mxu0 0.0
        %1895 = vmatpush1.msra.mxu0 0.0
        %1896 = vmatprep.mubr.f32.mxu0 %v1726
        %1897 = vmatmul.mubr.f32.gmra.mrb[0].mxu0 %v1173
        %v1898 = vpop.f32.mrb[0].mxu0
        %v1899 = vadd.f32 %v1822, %v1898
        %v1900 = vpop.f32.mrb[0].mxu0
        %v1901 = vadd.f32 %v1824, %v1900
        %1902 = vmatprep.mubr.f32.mxu0 %v1729
        %1903 = vmatmul.mubr.f32.gmra.mrb[0].mxu0 %v1177
        %v1904 = vpop.f32.mrb[0].mxu0
        %v1905 = vadd.f32 %v1828, %v1904
        %v1906 = vpop.f32.mrb[0].mxu0
        %v1907 = vadd.f32 %v1830, %v1906
        %1908 = vdwg.mxu0
        %1909 = vmatprep.subr.mxu0 %v1182
        %1910 = vmatpush1.msra.mxu0 %v1181
        %1911 = vmatprep.subr.mxu0 %v1190
        %1912 = vmatpush1.msra.mxu0 %v1189
        %1913 = vmatprep.subr.mxu0 %v1198
        %1914 = vmatpush1.msra.mxu0 %v1197
        %1915 = vmatprep.subr.mxu0 %v1206
        %1916 = vmatpush1.msra.mxu0 %v1205
        %1917 = vmatprep.subr.mxu0 %v1214
        %1918 = vmatpush1.msra.mxu0 %v1213
        %1919 = vmatprep.subr.mxu0 %v1222
        %1920 = vmatpush1.msra.mxu0 %v1221
        %1921 = vmatprep.subr.mxu0 %v1230
        %1922 = vmatpush1.msra.mxu0 %v1229
        %1923 = vmatprep.subr.mxu0 %v1238
        %1924 = vmatpush1.msra.mxu0 %v1237
        %1925 = vmatprep.subr.mxu0 %v1246
        %1926 = vmatpush1.msra.mxu0 %v1245
        %1927 = vmatprep.subr.mxu0 %v1254
        %1928 = vmatpush1.msra.mxu0 %v1253
        %1929 = vmatprep.subr.mxu0 %v1262
        %1930 = vmatpush1.msra.mxu0 %v1261
        %1931 = vmatprep.subr.mxu0 %v1270
        %1932 = vmatpush1.msra.mxu0 %v1269
        %1933 = vmatprep.subr.mxu0 %v1278
        %1934 = vmatpush1.msra.mxu0 %v1277
        %1935 = vmatprep.subr.mxu0 %v1286
        %1936 = vmatpush1.msra.mxu0 %v1285
        %1937 = vmatprep.subr.mxu0 %v1294
        %1938 = vmatpush1.msra.mxu0 %v1293
        %1939 = vmatprep.subr.mxu0 %v1302
        %1940 = vmatpush1.msra.mxu0 %v1301
        %1941 = vmatprep.subr.mxu0 %v1310
        %1942 = vmatpush1.msra.mxu0 %v1309
        %1943 = vmatprep.subr.mxu0 %v1318
        %1944 = vmatpush1.msra.mxu0 %v1317
        %1945 = vmatprep.subr.mxu0 %v1326
        %1946 = vmatpush1.msra.mxu0 %v1325
        %1947 = vmatprep.subr.mxu0 %v1334
        %1948 = vmatpush1.msra.mxu0 %v1333
        %1949 = vmatprep.subr.mxu0 %v1342
        %1950 = vmatpush1.msra.mxu0 %v1341
        %1951 = vmatprep.subr.mxu0 %v1350
        %1952 = vmatpush1.msra.mxu0 %v1349
        %1953 = vmatprep.subr.mxu0 %v1358
        %1954 = vmatpush1.msra.mxu0 %v1357
        %1955 = vmatprep.subr.mxu0 %v1366
        %1956 = vmatpush1.msra.mxu0 %v1365
        %1957 = vmatprep.subr.mxu0 %v1374
        %1958 = vmatpush1.msra.mxu0 %v1373
        %1959 = vmatprep.subr.mxu0 %v1382
        %1960 = vmatpush1.msra.mxu0 %v1381
        %1961 = vmatprep.subr.mxu0 %v1390
        %1962 = vmatpush1.msra.mxu0 %v1389
        %1963 = vmatprep.subr.mxu0 %v1398
        %1964 = vmatpush1.msra.mxu0 %v1397
        %1965 = vmatprep.subr.mxu0 %v1406
        %1966 = vmatpush1.msra.mxu0 %v1405
        %1967 = vmatprep.subr.mxu0 %v1414
        %1968 = vmatpush1.msra.mxu0 %v1413
        %1969 = vmatprep.subr.mxu0 %v1422
        %1970 = vmatpush1.msra.mxu0 %v1421
        %1971 = vmatprep.subr.mxu0 %v1430
        %1972 = vmatpush1.msra.mxu0 %v1429
        %1973 = vmatprep.mubr.f32.mxu0 %v1172
        %1974 = vmatmul.mubr.f32.gmra.mrb[0].mxu0 %v1171
        %v1975 = vpop.f32.mrb[0].mxu0
        %v1976 = vadd.f32 %v1696, %v1975
        %v1977 = vpop.f32.mrb[0].mxu0
        %v1978 = vadd.f32 %v1700, %v1977
        %1979 = vmatprep.mubr.f32.mxu0 %v1176
        %1980 = vmatmul.mubr.f32.gmra.mrb[0].mxu0 %v1175
        %v1981 = vpop.f32.mrb[0].mxu0
        %v1982 = vadd.f32 %v1696, %v1981
        %v1983 = vpop.f32.mrb[0].mxu0
        %v1984 = vadd.f32 %v1700, %v1983
        %1985 = vdwg.mxu0
        %1986 = vmatprep.subr.mxu0 %v1438
        %1987 = vmatpush1.msra.mxu0 %v1437
        %1988 = vmatprep.subr.mxu0 %v1446
        %1989 = vmatpush1.msra.mxu0 %v1445
        %1990 = vmatprep.subr.mxu0 %v1454
        %1991 = vmatpush1.msra.mxu0 %v1453
        %1992 = vmatprep.subr.mxu0 %v1462
        %1993 = vmatpush1.msra.mxu0 %v1461
        %1994 = vmatprep.subr.mxu0 %v1470
        %1995 = vmatpush1.msra.mxu0 %v1469
        %1996 = vmatprep.subr.mxu0 %v1478
        %1997 = vmatpush1.msra.mxu0 %v1477
        %1998 = vmatprep.subr.mxu0 %v1486
        %1999 = vmatpush1.msra.mxu0 %v1485
        %2000 = vmatprep.subr.mxu0 %v1494
        %2001 = vmatpush1.msra.mxu0 %v1493
        %2002 = vmatprep.subr.mxu0 %v1502
        %2003 = vmatpush1.msra.mxu0 %v1501
        %2004 = vmatprep.subr.mxu0 %v1510
        %2005 = vmatpush1.msra.mxu0 %v1509
        %2006 = vmatprep.subr.mxu0 %v1518
        %2007 = vmatpush1.msra.mxu0 %v1517
        %2008 = vmatprep.subr.mxu0 %v1526
        %2009 = vmatpush1.msra.mxu0 %v1525
        %2010 = vmatprep.subr.mxu0 %v1534
        %2011 = vmatpush1.msra.mxu0 %v1533
        %2012 = vmatprep.subr.mxu0 %v1542
        %2013 = vmatpush1.msra.mxu0 %v1541
        %2014 = vmatprep.subr.mxu0 %v1550
        %2015 = vmatpush1.msra.mxu0 %v1549
        %2016 = vmatprep.subr.mxu0 %v1558
        %2017 = vmatpush1.msra.mxu0 %v1557
        %2018 = vmatprep.subr.mxu0 %v1566
        %2019 = vmatpush1.msra.mxu0 %v1565
        %2020 = vmatprep.subr.mxu0 %v1574
        %2021 = vmatpush1.msra.mxu0 %v1573
        %2022 = vmatprep.subr.mxu0 %v1582
        %2023 = vmatpush1.msra.mxu0 %v1581
        %2024 = vmatprep.subr.mxu0 %v1590
        %2025 = vmatpush1.msra.mxu0 %v1589
        %2026 = vmatprep.subr.mxu0 %v1598
        %2027 = vmatpush1.msra.mxu0 %v1597
        %2028 = vmatprep.subr.mxu0 %v1606
        %2029 = vmatpush1.msra.mxu0 %v1605
        %2030 = vmatprep.subr.mxu0 %v1614
        %2031 = vmatpush1.msra.mxu0 %v1613
        %2032 = vmatprep.subr.mxu0 %v1622
        %2033 = vmatpush1.msra.mxu0 %v1621
        %2034 = vmatprep.subr.mxu0 %v1630
        %2035 = vmatpush1.msra.mxu0 %v1629
        %2036 = vmatprep.subr.mxu0 %v1638
        %2037 = vmatpush1.msra.mxu0 %v1637
        %2038 = vmatprep.subr.mxu0 %v1646
        %2039 = vmatpush1.msra.mxu0 %v1645
        %2040 = vmatprep.subr.mxu0 %v1654
        %2041 = vmatpush1.msra.mxu0 %v1653
        %2042 = vmatprep.subr.mxu0 %v1662
        %2043 = vmatpush1.msra.mxu0 %v1661
        %2044 = vmatprep.subr.mxu0 %v1670
        %2045 = vmatpush1.msra.mxu0 %v1669
        %2046 = vmatprep.subr.mxu0 %v1741
        %2047 = vmatpush1.msra.mxu0 %v1738
        %2048 = vmatprep.subr.mxu0 0.0
        %2049 = vmatpush1.msra.mxu0 0.0
        %2050 = vmatprep.mubr.f32.mxu0 %v1726
        %2051 = vmatmul.mubr.f32.gmra.mrb[0].mxu0 %v1173
        %v2052 = vpop.f32.mrb[0].mxu0
        %v2053 = vadd.f32 %v1976, %v2052
        %v2054 = vpop.f32.mrb[0].mxu0
        %v2055 = vadd.f32 %v1978, %v2054
        %2056 = vmatprep.mubr.f32.mxu0 %v1729
        %2057 = vmatmul.mubr.f32.gmra.mrb[0].mxu0 %v1177
        %v2058 = vpop.f32.mrb[0].mxu0
        %v2059 = vadd.f32 %v1982, %v2058
        %v2060 = vpop.f32.mrb[0].mxu0
        %v2061 = vadd.f32 %v1984, %v2060
        %2062 = vdwg.mxu0
        %2063 = vmatprep.subr.mxu0 %v1184
        %2064 = vmatpush1.msra.mxu0 %v1183
        %2065 = vmatprep.subr.mxu0 %v1192
        %2066 = vmatpush1.msra.mxu0 %v1191
        %2067 = vmatprep.subr.mxu0 %v1200
        %2068 = vmatpush1.msra.mxu0 %v1199
        %2069 = vmatprep.subr.mxu0 %v1208
        %2070 = vmatpush1.msra.mxu0 %v1207
        %2071 = vmatprep.subr.mxu0 %v1216
        %2072 = vmatpush1.msra.mxu0 %v1215
        %2073 = vmatprep.subr.mxu0 %v1224
        %2074 = vmatpush1.msra.mxu0 %v1223
        %2075 = vmatprep.subr.mxu0 %v1232
        %2076 = vmatpush1.msra.mxu0 %v1231
        %2077 = vmatprep.subr.mxu0 %v1240
        %2078 = vmatpush1.msra.mxu0 %v1239
        %2079 = vmatprep.subr.mxu0 %v1248
        %2080 = vmatpush1.msra.mxu0 %v1247
        %2081 = vmatprep.subr.mxu0 %v1256
        %2082 = vmatpush1.msra.mxu0 %v1255
        %2083 = vmatprep.subr.mxu0 %v1264
        %2084 = vmatpush1.msra.mxu0 %v1263
        %2085 = vmatprep.subr.mxu0 %v1272
        %2086 = vmatpush1.msra.mxu0 %v1271
        %2087 = vmatprep.subr.mxu0 %v1280
        %2088 = vmatpush1.msra.mxu0 %v1279
        %2089 = vmatprep.subr.mxu0 %v1288
        %2090 = vmatpush1.msra.mxu0 %v1287
        %2091 = vmatprep.subr.mxu0 %v1296
        %2092 = vmatpush1.msra.mxu0 %v1295
        %2093 = vmatprep.subr.mxu0 %v1304
        %2094 = vmatpush1.msra.mxu0 %v1303
        %2095 = vmatprep.subr.mxu0 %v1312
        %2096 = vmatpush1.msra.mxu0 %v1311
        %2097 = vmatprep.subr.mxu0 %v1320
        %2098 = vmatpush1.msra.mxu0 %v1319
        %2099 = vmatprep.subr.mxu0 %v1328
        %2100 = vmatpush1.msra.mxu0 %v1327
        %2101 = vmatprep.subr.mxu0 %v1336
        %2102 = vmatpush1.msra.mxu0 %v1335
        %2103 = vmatprep.subr.mxu0 %v1344
        %2104 = vmatpush1.msra.mxu0 %v1343
        %2105 = vmatprep.subr.mxu0 %v1352
        %2106 = vmatpush1.msra.mxu0 %v1351
        %2107 = vmatprep.subr.mxu0 %v1360
        %2108 = vmatpush1.msra.mxu0 %v1359
        %2109 = vmatprep.subr.mxu0 %v1368
        %2110 = vmatpush1.msra.mxu0 %v1367
        %2111 = vmatprep.subr.mxu0 %v1376
        %2112 = vmatpush1.msra.mxu0 %v1375
        %2113 = vmatprep.subr.mxu0 %v1384
        %2114 = vmatpush1.msra.mxu0 %v1383
        %2115 = vmatprep.subr.mxu0 %v1392
        %2116 = vmatpush1.msra.mxu0 %v1391
        %2117 = vmatprep.subr.mxu0 %v1400
        %2118 = vmatpush1.msra.mxu0 %v1399
        %2119 = vmatprep.subr.mxu0 %v1408
        %2120 = vmatpush1.msra.mxu0 %v1407
        %2121 = vmatprep.subr.mxu0 %v1416
        %2122 = vmatpush1.msra.mxu0 %v1415
        %2123 = vmatprep.subr.mxu0 %v1424
        %2124 = vmatpush1.msra.mxu0 %v1423
        %2125 = vmatprep.subr.mxu0 %v1432
        %2126 = vmatpush1.msra.mxu0 %v1431
        %2127 = vmatprep.mubr.f32.mxu0 %v1172
        %2128 = vmatmul.mubr.f32.gmra.mrb[0].mxu0 %v1171
        %v2129 = vpop.f32.mrb[0].mxu0
        %v2130 = vadd.f32 %v1704, %v2129
        %v2131 = vpop.f32.mrb[0].mxu0
        %v2132 = vadd.f32 %v1708, %v2131
        %2133 = vmatprep.mubr.f32.mxu0 %v1176
        %2134 = vmatmul.mubr.f32.gmra.mrb[0].mxu0 %v1175
        %v2135 = vpop.f32.mrb[0].mxu0
        %v2136 = vadd.f32 %v1704, %v2135
        %v2137 = vpop.f32.mrb[0].mxu0
        %v2138 = vadd.f32 %v1708, %v2137
        %2139 = vdwg.mxu0
        %2140 = vmatprep.subr.mxu0 %v1440
        %2141 = vmatpush1.msra.mxu0 %v1439
        %2142 = vmatprep.subr.mxu0 %v1448
        %2143 = vmatpush1.msra.mxu0 %v1447
        %2144 = vmatprep.subr.mxu0 %v1456
        %2145 = vmatpush1.msra.mxu0 %v1455
        %2146 = vmatprep.subr.mxu0 %v1464
        %2147 = vmatpush1.msra.mxu0 %v1463
        %2148 = vmatprep.subr.mxu0 %v1472
        %2149 = vmatpush1.msra.mxu0 %v1471
        %2150 = vmatprep.subr.mxu0 %v1480
        %2151 = vmatpush1.msra.mxu0 %v1479
        %2152 = vmatprep.subr.mxu0 %v1488
        %2153 = vmatpush1.msra.mxu0 %v1487
        %2154 = vmatprep.subr.mxu0 %v1496
        %2155 = vmatpush1.msra.mxu0 %v1495
        %2156 = vmatprep.subr.mxu0 %v1504
        %2157 = vmatpush1.msra.mxu0 %v1503
        %2158 = vmatprep.subr.mxu0 %v1512
        %2159 = vmatpush1.msra.mxu0 %v1511
        %2160 = vmatprep.subr.mxu0 %v1520
        %2161 = vmatpush1.msra.mxu0 %v1519
        %2162 = vmatprep.subr.mxu0 %v1528
        %2163 = vmatpush1.msra.mxu0 %v1527
        %2164 = vmatprep.subr.mxu0 %v1536
        %2165 = vmatpush1.msra.mxu0 %v1535
        %2166 = vmatprep.subr.mxu0 %v1544
        %2167 = vmatpush1.msra.mxu0 %v1543
        %2168 = vmatprep.subr.mxu0 %v1552
        %2169 = vmatpush1.msra.mxu0 %v1551
        %2170 = vmatprep.subr.mxu0 %v1560
        %2171 = vmatpush1.msra.mxu0 %v1559
        %2172 = vmatprep.subr.mxu0 %v1568
        %2173 = vmatpush1.msra.mxu0 %v1567
        %2174 = vmatprep.subr.mxu0 %v1576
        %2175 = vmatpush1.msra.mxu0 %v1575
        %2176 = vmatprep.subr.mxu0 %v1584
        %2177 = vmatpush1.msra.mxu0 %v1583
        %2178 = vmatprep.subr.mxu0 %v1592
        %2179 = vmatpush1.msra.mxu0 %v1591
        %2180 = vmatprep.subr.mxu0 %v1600
        %2181 = vmatpush1.msra.mxu0 %v1599
        %2182 = vmatprep.subr.mxu0 %v1608
        %2183 = vmatpush1.msra.mxu0 %v1607
        %2184 = vmatprep.subr.mxu0 %v1616
        %2185 = vmatpush1.msra.mxu0 %v1615
        %2186 = vmatprep.subr.mxu0 %v1624
        %2187 = vmatpush1.msra.mxu0 %v1623
        %2188 = vmatprep.subr.mxu0 %v1632
        %2189 = vmatpush1.msra.mxu0 %v1631
        %2190 = vmatprep.subr.mxu0 %v1640
        %2191 = vmatpush1.msra.mxu0 %v1639
        %2192 = vmatprep.subr.mxu0 %v1648
        %2193 = vmatpush1.msra.mxu0 %v1647
        %2194 = vmatprep.subr.mxu0 %v1656
        %2195 = vmatpush1.msra.mxu0 %v1655
        %2196 = vmatprep.subr.mxu0 %v1664
        %2197 = vmatpush1.msra.mxu0 %v1663
        %2198 = vmatprep.subr.mxu0 %v1672
        %2199 = vmatpush1.msra.mxu0 %v1671
        %2200 = vmatprep.subr.mxu0 %v1747
        %2201 = vmatpush1.msra.mxu0 %v1744
        %2202 = vmatprep.subr.mxu0 0.0
        %2203 = vmatpush1.msra.mxu0 0.0
        %2204 = vmatprep.mubr.f32.mxu0 %v1726
        %2205 = vmatmul.mubr.f32.gmra.mrb[0].mxu0 %v1173
        %v2206 = vpop.f32.mrb[0].mxu0
        %v2207 = vadd.f32 %v2130, %v2206
        %v2208 = vpop.f32.mrb[0].mxu0
        %v2209 = vadd.f32 %v2132, %v2208
        %2210 = vmatprep.mubr.f32.mxu0 %v1729
        %2211 = vmatmul.mubr.f32.gmra.mrb[0].mxu0 %v1177
        %v2212 = vpop.f32.mrb[0].mxu0
        %v2213 = vadd.f32 %v2136, %v2212
        %v2214 = vpop.f32.mrb[0].mxu0
        %v2215 = vadd.f32 %v2138, %v2214
        %2216 = vdwg.mxu0
        %2217 = vmatprep.subr.mxu0 %v1186
        %2218 = vmatpush1.msra.mxu0 %v1185
        %2219 = vmatprep.subr.mxu0 %v1194
        %2220 = vmatpush1.msra.mxu0 %v1193
        %2221 = vmatprep.subr.mxu0 %v1202
        %2222 = vmatpush1.msra.mxu0 %v1201
        %2223 = vmatprep.subr.mxu0 %v1210
        %2224 = vmatpush1.msra.mxu0 %v1209
        %2225 = vmatprep.subr.mxu0 %v1218
        %2226 = vmatpush1.msra.mxu0 %v1217
        %2227 = vmatprep.subr.mxu0 %v1226
        %2228 = vmatpush1.msra.mxu0 %v1225
        %2229 = vmatprep.subr.mxu0 %v1234
        %2230 = vmatpush1.msra.mxu0 %v1233
        %2231 = vmatprep.subr.mxu0 %v1242
        %2232 = vmatpush1.msra.mxu0 %v1241
        %2233 = vmatprep.subr.mxu0 %v1250
        %2234 = vmatpush1.msra.mxu0 %v1249
        %2235 = vmatprep.subr.mxu0 %v1258
        %2236 = vmatpush1.msra.mxu0 %v1257
        %2237 = vmatprep.subr.mxu0 %v1266
        %2238 = vmatpush1.msra.mxu0 %v1265
        %2239 = vmatprep.subr.mxu0 %v1274
        %2240 = vmatpush1.msra.mxu0 %v1273
        %2241 = vmatprep.subr.mxu0 %v1282
        %2242 = vmatpush1.msra.mxu0 %v1281
        %2243 = vmatprep.subr.mxu0 %v1290
        %2244 = vmatpush1.msra.mxu0 %v1289
        %2245 = vmatprep.subr.mxu0 %v1298
        %2246 = vmatpush1.msra.mxu0 %v1297
        %2247 = vmatprep.subr.mxu0 %v1306
        %2248 = vmatpush1.msra.mxu0 %v1305
        %2249 = vmatprep.subr.mxu0 %v1314
        %2250 = vmatpush1.msra.mxu0 %v1313
        %2251 = vmatprep.subr.mxu0 %v1322
        %2252 = vmatpush1.msra.mxu0 %v1321
        %2253 = vmatprep.subr.mxu0 %v1330
        %2254 = vmatpush1.msra.mxu0 %v1329
        %2255 = vmatprep.subr.mxu0 %v1338
        %2256 = vmatpush1.msra.mxu0 %v1337
        %2257 = vmatprep.subr.mxu0 %v1346
        %2258 = vmatpush1.msra.mxu0 %v1345
        %2259 = vmatprep.subr.mxu0 %v1354
        %2260 = vmatpush1.msra.mxu0 %v1353
        %2261 = vmatprep.subr.mxu0 %v1362
        %2262 = vmatpush1.msra.mxu0 %v1361
        %2263 = vmatprep.subr.mxu0 %v1370
        %2264 = vmatpush1.msra.mxu0 %v1369
        %2265 = vmatprep.subr.mxu0 %v1378
        %2266 = vmatpush1.msra.mxu0 %v1377
        %2267 = vmatprep.subr.mxu0 %v1386
        %2268 = vmatpush1.msra.mxu0 %v1385
        %2269 = vmatprep.subr.mxu0 %v1394
        %2270 = vmatpush1.msra.mxu0 %v1393
        %2271 = vmatprep.subr.mxu0 %v1402
        %2272 = vmatpush1.msra.mxu0 %v1401
        %2273 = vmatprep.subr.mxu0 %v1410
        %2274 = vmatpush1.msra.mxu0 %v1409
        %2275 = vmatprep.subr.mxu0 %v1418
        %2276 = vmatpush1.msra.mxu0 %v1417
        %2277 = vmatprep.subr.mxu0 %v1426
        %2278 = vmatpush1.msra.mxu0 %v1425
        %2279 = vmatprep.subr.mxu0 %v1434
        %2280 = vmatpush1.msra.mxu0 %v1433
        %2281 = vmatprep.mubr.f32.mxu0 %v1172
        %2282 = vmatmul.mubr.f32.gmra.mrb[0].mxu0 %v1171
        %v2283 = vpop.f32.mrb[0].mxu0
        %v2284 = vadd.f32 %v1712, %v2283
        %v2285 = vpop.f32.mrb[0].mxu0
        %v2286 = vadd.f32 %v1716, %v2285
        %2287 = vmatprep.mubr.f32.mxu0 %v1176
        %2288 = vmatmul.mubr.f32.gmra.mrb[0].mxu0 %v1175
        %v2289 = vpop.f32.mrb[0].mxu0
        %v2290 = vadd.f32 %v1712, %v2289
        %v2291 = vpop.f32.mrb[0].mxu0
        %v2292 = vadd.f32 %v1716, %v2291
        %2293 = vdwg.mxu0
        %2294 = vmatprep.subr.mxu0 %v1442
        %2295 = vmatpush1.msra.mxu0 %v1441
        %2296 = vmatprep.subr.mxu0 %v1450
        %2297 = vmatpush1.msra.mxu0 %v1449
        %2298 = vmatprep.subr.mxu0 %v1458
        %2299 = vmatpush1.msra.mxu0 %v1457
        %2300 = vmatprep.subr.mxu0 %v1466
        %2301 = vmatpush1.msra.mxu0 %v1465
        %2302 = vmatprep.subr.mxu0 %v1474
        %2303 = vmatpush1.msra.mxu0 %v1473
        %2304 = vmatprep.subr.mxu0 %v1482
        %2305 = vmatpush1.msra.mxu0 %v1481
        %2306 = vmatprep.subr.mxu0 %v1490
        %2307 = vmatpush1.msra.mxu0 %v1489
        %2308 = vmatprep.subr.mxu0 %v1498
        %2309 = vmatpush1.msra.mxu0 %v1497
        %2310 = vmatprep.subr.mxu0 %v1506
        %2311 = vmatpush1.msra.mxu0 %v1505
        %2312 = vmatprep.subr.mxu0 %v1514
        %2313 = vmatpush1.msra.mxu0 %v1513
        %2314 = vmatprep.subr.mxu0 %v1522
        %2315 = vmatpush1.msra.mxu0 %v1521
        %2316 = vmatprep.subr.mxu0 %v1530
        %2317 = vmatpush1.msra.mxu0 %v1529
        %2318 = vmatprep.subr.mxu0 %v1538
        %2319 = vmatpush1.msra.mxu0 %v1537
        %2320 = vmatprep.subr.mxu0 %v1546
        %2321 = vmatpush1.msra.mxu0 %v1545
        %2322 = vmatprep.subr.mxu0 %v1554
        %2323 = vmatpush1.msra.mxu0 %v1553
        %2324 = vmatprep.subr.mxu0 %v1562
        %2325 = vmatpush1.msra.mxu0 %v1561
        %2326 = vmatprep.subr.mxu0 %v1570
        %2327 = vmatpush1.msra.mxu0 %v1569
        %2328 = vmatprep.subr.mxu0 %v1578
        %2329 = vmatpush1.msra.mxu0 %v1577
        %2330 = vmatprep.subr.mxu0 %v1586
        %2331 = vmatpush1.msra.mxu0 %v1585
        %2332 = vmatprep.subr.mxu0 %v1594
        %2333 = vmatpush1.msra.mxu0 %v1593
        %2334 = vmatprep.subr.mxu0 %v1602
        %2335 = vmatpush1.msra.mxu0 %v1601
        %2336 = vmatprep.subr.mxu0 %v1610
        %2337 = vmatpush1.msra.mxu0 %v1609
        %2338 = vmatprep.subr.mxu0 %v1618
        %2339 = vmatpush1.msra.mxu0 %v1617
        %2340 = vmatprep.subr.mxu0 %v1626
        %2341 = vmatpush1.msra.mxu0 %v1625
        %2342 = vmatprep.subr.mxu0 %v1634
        %2343 = vmatpush1.msra.mxu0 %v1633
        %2344 = vmatprep.subr.mxu0 %v1642
        %2345 = vmatpush1.msra.mxu0 %v1641
        %2346 = vmatprep.subr.mxu0 %v1650
        %2347 = vmatpush1.msra.mxu0 %v1649
        %2348 = vmatprep.subr.mxu0 %v1658
        %2349 = vmatpush1.msra.mxu0 %v1657
        %2350 = vmatprep.subr.mxu0 %v1666
        %2351 = vmatpush1.msra.mxu0 %v1665
        %2352 = vmatprep.subr.mxu0 %v1674
        %2353 = vmatpush1.msra.mxu0 %v1673
        %2354 = vmatprep.subr.mxu0 %v1753
        %2355 = vmatpush1.msra.mxu0 %v1750
        %2356 = vmatprep.subr.mxu0 0.0
        %2357 = vmatpush1.msra.mxu0 0.0
        %2358 = vmatprep.mubr.f32.mxu0 %v1726
        %2359 = vmatmul.mubr.f32.gmra.mrb[0].mxu0 %v1173
        %v2360 = vpop.f32.mrb[0].mxu0
        %v2361 = vadd.f32 %v2284, %v2360
        %v2362 = vpop.f32.mrb[0].mxu0
        %v2363 = vadd.f32 %v2286, %v2362
        %2364 = vmatprep.mubr.f32.mxu0 %v1729
        %2365 = vmatmul.mubr.f32.gmra.mrb[0].mxu0 %v1177
        %v2366 = vpop.f32.mrb[0].mxu0
        %v2367 = vadd.f32 %v2290, %v2366
        %v2368 = vpop.f32.mrb[0].mxu0
        %v2369 = vadd.f32 %v2292, %v2368
        %2370 = vdwg.mxu0
        %2371 = vst [vmem:[%s618] sm:$0xff] %v1899
        %2372 = vst [vmem:[%s618 + $0x8] sm:$0xff] %v1901
        %2373 = vst [vmem:[%s618 + $0x10] sm:$0xff] %v2053
        %2374 = vst [vmem:[%s618 + $0x18] sm:$0xff] %v2055
        %2375 = vst [vmem:[%s618 + $0x20] sm:$0xff] %v2207
        %2376 = vst [vmem:[%s618 + $0x28] sm:$0xff] %v2209
        %2377 = vst [vmem:[%s618 + $0x30] sm:$0xff] %v2361
        %2378 = vst [vmem:[%s618 + $0x38] sm:$0xff] %v2363
        %2379 = vst [vmem:[%s618 + $0x40] sm:$0xff] %v1905
        %2380 = vst [vmem:[%s618 + $0x48] sm:$0xff] %v1907
        %2381 = vst [vmem:[%s618 + $0x50] sm:$0xff] %v2059
        %2382 = vst [vmem:[%s618 + $0x58] sm:$0xff] %v2061
        %2383 = vst [vmem:[%s618 + $0x60] sm:$0xff] %v2213
        %2384 = vst [vmem:[%s618 + $0x68] sm:$0xff] %v2215
        %2385 = vst [vmem:[%s618 + $0x70] sm:$0xff] %v2367
        %2386 = vst [vmem:[%s618 + $0x78] sm:$0xff] %v2369
        %s2387 = sand.u32 %s324, 1
        %s2388 = scalar_lea.sflag [#allocation4], %s2387
        %s2389 = sand.u32 %s324, 1
        %s2390 = smul.addr %s2389, 128
        %s2391 = scalar_lea.vmem [#allocation21], %s2390
        // Predicated region
        $region121: #{tpu_custom_call.1} parent=71 // pred_check
          %p2392 = pneg %p334
        $region122: #{tpu_custom_call.1} parent=71 // pred_check_branch
          %2394 = sbr.rel (%p2392) target = $region124
        $region123: #{tpu_custom_call.1} parent=71 // pred_region
          %s2395 = smul.u32 8, %s33
          %s2397 = ssub.s32 2048, 2048
          %2398 = vsyncadd %s2388, %s2397
          %s2399 = smul.addr %s2395, 128
          %s2400 = scalar_lea.hbm %s13, %s2399
          %s2401 = sshll.u32 %s2391, 4
          %s2402 = int_to_ptr.vmem [resolvable:$true] %s2401
          %2407 = dma.vmem_to_hbm [thread:$0]  %s2402, 2048, %s2400, %s2388, 1024, 6144, 64
        $region124: #{tpu_custom_call.1} parent=71 // pred_fallthru
          _
      $region72: #{tpu_custom_call.1} parent=5 // pred_fallthru
        _
      %p2408 = scmp.le.s32.totalorder 2, %s28
      // Predicated region
      $region125: #{tpu_custom_call.1} parent=5 // pred_check
        %p2409 = pneg %p2408
      $region126: #{tpu_custom_call.1} parent=5 // pred_check_branch
        %2411 = sbr.rel (%p2409) target = $region128
      $region127: #{tpu_custom_call.1} parent=5 // pred_region
        %s2412 = ssub.s32 %s28, 2
        // Predicated region
        $region129: #{tpu_custom_call.1} parent=127 // pred_check
          %p2413 = pneg %p340
        $region130: #{tpu_custom_call.1} parent=127 // pred_check_branch
          %2415 = sbr.rel (%p2413) target = $region132
        $region131: #{tpu_custom_call.1} parent=127 // pred_region
          %s2416 = sand.u32 %s325, 1
          %s2417 = scalar_lea.sflag [#allocation4], %s2416
          %s2418 = sand.u32 %s325, 1
          %s2419 = smul.addr %s2418, 128
          %s2420 = scalar_lea.vmem [#allocation21], %s2419
          %2421 = dma.done %s2417, 2048
        $region132: #{tpu_custom_call.1} parent=127 // pred_fallthru
          _
      $region128: #{tpu_custom_call.1} parent=5 // pred_fallthru
        _
    $region6: #{tpu_custom_call.1} parent=1 // loop_footer
      %s32 = sadd.s32 1, %s28
    $region7: #{tpu_custom_call.1} parent=1 // loop_footer_branch
      %27 = sbr.rel target = $region3
    $region8: #{tpu_custom_call.1} parent=1 // loop_exit
      _
    %2422 = vsyncpa [#allocation3], 1
    %s2423 = scalar_lea.sflag [#allocation3], 1
    %2424 = vsyncpa %s2423, 1
    %2425 = vsyncpa [#allocation6], 1
    %2426 = vsyncpa [#allocation9], 1
    %2427 = vsyncpa [#allocation12], 1
    %2428 = vsyncpa [#allocation15], 1
    %2429 = vsyncpa [#allocation18], 1
    %2430 = vsyncpa [#allocation4], 1
    %s2431 = scalar_lea.sflag [#allocation4], 1
    %2432 = vsyncpa %s2431, 1

</llo_original>
